<compile_context>
chip_gen: v6e
topology: v6e:2x2x1
jax: 0.10.0
libtpu: 0.0.40
codegen_flags: <defaults>
</compile_context>

<pallas_src>
import numpy as np
import jax
import jax.numpy as jnp
from jax import lax
from jax.experimental import pallas as pl
from jax.experimental.pallas import tpu as pltpu

GUARD = 128          # lane-aligned zero halo on the flattened HW axis (must be >= W+1)


# ----------------------------- weight prep -----------------------------------

def _oihw_to_mat(w):
    """OIHW conv weight -> (Cout, 9*Cin); K ordered (dy, dx, cin) to match the
    in-kernel column gather."""
    co, ci, kh, kw = w.shape
    return jnp.transpose(w, (0, 2, 3, 1)).reshape(co, kh * kw * ci)


# ------------------------------- forward --------------------------------------

def sam_forward(x_nchw, xlast_nchw, rimg_nchw, params, k=3):
    """SAM.forward. Inputs NCHW (PyTorch convention); weights OIHW; returns NCHW."""
    assert k == 3, "only kernel_size=3 ('same', padding=1) is supported"
    w1, w2, w3, w4 = params
    B, Cf, H, W = x_nchw.shape
    assert W + 1 <= GUARD, "row halo must fit inside the 128-lane guard"
    HW = H * W
    Lp = HW + 2 * GUARD
    base_off = GUARD - W - 1            # flat offset of tap (dy=0, dx=0)

    def pad_flat(a):
        # (B, C, H, W) -> (B, C, Lp) bf16; x[c, i, j] lands at flat index GUARD + i*W + j
        a = a.astype(jnp.bfloat16).reshape(B, a.shape[1], HW)
        return jnp.pad(a, ((0, 0), (0, 0), (GUARD, GUARD)))

    xp = pad_flat(x_nchw)                                            # (B, Cf, Lp)
    xlp = pad_flat(xlast_nchw)                                       # (B, Cf, Lp)
    # r_img laid out lane-dense as (3, B*HW) to match the fused lane axis.
    rimg = jnp.transpose(rimg_nchw.astype(jnp.bfloat16).reshape(B, 3, HW),
                         (1, 0, 2)).reshape(3, B * HW)

    # One block-diagonal weight for conv1/conv4/conv2. Row order [conv1, conv4, conv2]
    # keeps the y-slices starting on 8-row (f32 sublane tile) boundaries.
    w1m = _oihw_to_mat(w1)                                           # (Cf, 9*Cf)
    w2m = _oihw_to_mat(w2)                                           # (3,  9*Cf)
    w4m = _oihw_to_mat(w4)                                           # (Cf, 9*Cf)
    zf = jnp.zeros((Cf, 9 * Cf), jnp.float32)
    z3 = jnp.zeros((3, 9 * Cf), jnp.float32)
    wbig = jnp.concatenate([
        jnp.concatenate([w1m, zf], axis=1),     # conv1 <- x columns
        jnp.concatenate([zf, w4m], axis=1),     # conv4 <- x_last columns
        jnp.concatenate([w2m, z3], axis=1),     # conv2 <- x columns
    ], axis=0).astype(jnp.bfloat16)                                  # (2*Cf+3, 18*Cf)
    w3m = _oihw_to_mat(w3).astype(jnp.bfloat16)                      # (Cf, 27)

    def kernel(xp_ref, xlp_ref, rimg_ref, wbig_ref, w3_ref, out_ref):
        # Column-in-row index over the padded flat axis; guards hold zeros so masking
        # there is irrelevant.  Broadcast the masks once (JAX does not CSE broadcasts).
        pcol = lax.broadcasted_iota(jnp.int32, (1, Lp), 1)
        cc = (pcol + ((-GUARD) % W)) % W
        keep_l1 = cc != (W - 1)      # dx=0 taps never legitimately read column W-1
        keep_r1 = cc != 0            # dx=2 taps never legitimately read column 0
        keep_l_c = jnp.broadcast_to(keep_l1, (Cf, Lp))
        keep_r_c = jnp.broadcast_to(keep_r1, (Cf, Lp))
        keep_l_3 = jnp.broadcast_to(keep_l1, (3, Lp))
        keep_r_3 = jnp.broadcast_to(keep_r1, (3, Lp))

        def taps(flat, keep_l, keep_r):
            # flat: (C, Lp) f32.  Two pre-masked copies replace 6 per-tap selects.
            fl = jnp.where(keep_l, flat, 0.0)
            fr = jnp.where(keep_r, flat, 0.0)
            out = []
            for dy in range(3):
                for dx in range(3):
                    src = fl if dx == 0 else (fr if dx == 2 else flat)
                    off = base_off + dy * W + dx
                    out.append(src[:, off:off + HW])      # (C, HW) f32, static slice
            return out

        # ---- gather x / x_last columns for all images (f32, tile-aligned concat) ----
        cols_chunks, xres_chunks = [], []
        for b in range(B):
            xf = xp_ref[b].astype(jnp.float32)            # (Cf, Lp)
            xlf = xlp_ref[b].astype(jnp.float32)
            cols_chunks.append(jnp.concatenate(
                taps(xf, keep_l_c, keep_r_c) + taps(xlf, keep_l_c, keep_r_c), axis=0))
            xres_chunks.append(xf[:, GUARD:GUARD + HW])   # residual x (aligned slice)
        cols = jnp.concatenate(cols_chunks, axis=1).astype(jnp.bfloat16)  # (18Cf, B*HW)
        xres = jnp.concatenate(xres_chunks, axis=1)                       # (Cf, B*HW) f32

        # ---- conv1 + conv4 + conv2 in ONE MXU pass ----
        y = jnp.dot(wbig_ref[...], cols, preferred_element_type=jnp.float32)
        x1 = y[:Cf, :]                                    # conv1(x)
        c4 = y[Cf:2 * Cf, :]                              # conv4(x_last)
        img = y[2 * Cf:, :] + rimg_ref[...].astype(jnp.float32)   # conv2(x) + r_img

        # ---- conv3(img): lane-aligned in-register pad + same gather, bf16 on the MXU ----
        zg = jnp.zeros((3, GUARD), jnp.float32)
        img_chunks = []
        for b in range(B):
            img_p = jnp.concatenate([zg, img[:, b * HW:(b + 1) * HW], zg], axis=1)
            img_chunks.append(jnp.concatenate(taps(img_p, keep_l_3, keep_r_3), axis=0))
        cols_img = jnp.concatenate(img_chunks, axis=1).astype(jnp.bfloat16)  # (27, B*HW)
        x2 = jax.nn.sigmoid(jnp.dot(w3_ref[...], cols_img,
                                    preferred_element_type=jnp.float32))

        # ---- f32 epilogue, lane-dense per-image stores ----
        out = x1 * x2 + xres + c4                         # (Cf, B*HW) f32
        for b in range(B):
            out_ref[b] = out[:, b * HW:(b + 1) * HW].astype(out_ref.dtype)

    # Advisory cost model so XLA schedules the surrounding pad/reshape ops well.
    flops = 2 * B * HW * ((2 * Cf + 3) * 18 * Cf + Cf * 27) \
        + 4 * B * Cf * HW + 3 * B * HW
    bytes_accessed = (xp.size + xlp.size + rimg.size + wbig.size + w3m.size) * 2 \
        + B * Cf * HW * 4

    out = pl.pallas_call(
        kernel,
        out_shape=jax.ShapeDtypeStruct((B, Cf, HW), jnp.float32),
        grid=(1,),
        in_specs=[
            pl.BlockSpec((B, Cf, Lp), lambda i: (0, 0, 0)),
            pl.BlockSpec((B, Cf, Lp), lambda i: (0, 0, 0)),
            pl.BlockSpec((3, B * HW), lambda i: (0, 0)),
            pl.BlockSpec(wbig.shape, lambda i: (0, 0)),
            pl.BlockSpec(w3m.shape, lambda i: (0, 0)),
        ],
        out_specs=pl.BlockSpec((B, Cf, HW), lambda i: (0, 0, 0)),
        compiler_params=pltpu.CompilerParams(
            dimension_semantics=("arbitrary",)),
        cost_estimate=pl.CostEstimate(
            flops=int(flops),
            transcendentals=int(2 * B * Cf * HW),     # sigmoid ~ exp + reciprocal
            bytes_accessed=int(bytes_accessed)),
    )(xp, xlp, rimg, wbig, w3m)

    # (B, Cf, HW) channels-first layout is already NCHW after a free reshape.
    return out.reshape(B, Cf, H, W)


# ------------------------------ reference ------------------------------------

def _conv_ref(x_nhwc, w_oihw):
    w_hwio = jnp.transpose(w_oihw, (2, 3, 1, 0))
    return lax.conv_general_dilated(
        x_nhwc, w_hwio, window_strides=(1, 1), padding="SAME",
        dimension_numbers=("NHWC", "HWIO", "NHWC"),
        precision=lax.Precision.HIGHEST)


def sam_reference(x_nchw, xlast_nchw, rimg_nchw, params):
    w1, w2, w3, w4 = params
    x = jnp.transpose(x_nchw, (0, 2, 3, 1))
    xl = jnp.transpose(xlast_nchw, (0, 2, 3, 1))
    rimg = jnp.transpose(rimg_nchw, (0, 2, 3, 1))
    x1 = _conv_ref(x, w1)
    img = _conv_ref(x, w2) + rimg
    x2 = jax.nn.sigmoid(_conv_ref(img, w3))
    xlc = _conv_ref(xl, w4)
    out = x1 * x2 + x + xlc
    return jnp.transpose(out, (0, 3, 1, 2))


# --------------------------------- main ---------------------------------------

if __name__ == "__main__":
    B, n_feat, H, W = 2, 8, 16, 16
    k = 3   # kernel_size; bias=False (default of the reference `conv` helper)

    key = jax.random.PRNGKey(0)
    k1, k2, k3, k4, kx, kl, kr = jax.random.split(key, 7)

    # Deterministic synthetic parameters (OIHW, matching nn.Conv2d weight shape)
    w1 = 0.1 * jax.random.normal(k1, (n_feat, n_feat, k, k), jnp.float32)
    w2 = 0.1 * jax.random.normal(k2, (3, n_feat, k, k), jnp.float32)
    w3 = 0.1 * jax.random.normal(k3, (n_feat, 3, k, k), jnp.float32)
    w4 = 0.1 * jax.random.normal(k4, (n_feat, n_feat, k, k), jnp.float32)
    params = (w1, w2, w3, w4)

    # Inputs in PyTorch NCHW convention
    x = jax.random.normal(kx, (B, n_feat, H, W), jnp.float32)
    x_last = jax.random.normal(kl, (B, n_feat, H, W), jnp.float32)
    r_img = jax.random.normal(kr, (B, 3, H, W), jnp.float32)

    fwd = jax.jit(sam_forward, static_argnames=("k",))
    out = jax.block_until_ready(fwd(x, x_last, r_img, params, k=k))

    ref = jax.block_until_ready(sam_reference(x, x_last, r_img, params))
    # bf16 inputs/weights with f32 accumulation (incl. bf16 operands through conv3
    # and the bf16-rounded residual x) -> relaxed tolerance; any gather/mask bug
    # would show up as O(0.1..1) edge errors.
    np.testing.assert_allclose(np.asarray(out), np.asarray(ref),
                               rtol=2e-2, atol=3e-2)

    print("KERNEL_OK")
</pallas_src>

<mosaic_0001>
module attributes {stable_mosaic.version = 11 : i64} {
  func.func @kernel(%arg0: i32, %arg1: memref<2x8x512xbf16, #tpu.memory_space<vmem>>, %arg2: memref<2x8x512xbf16, #tpu.memory_space<vmem>>, %arg3: memref<3x512xbf16, #tpu.memory_space<vmem>>, %arg4: memref<19x144xbf16, #tpu.memory_space<vmem>>, %arg5: memref<8x27xbf16, #tpu.memory_space<vmem>>, %arg6: memref<2x8x256xf32, #tpu.memory_space<vmem>>) attributes {dimension_semantics = [#tpu.dimension_semantics<arbitrary>], iteration_bounds = array<i64: 1>, scalar_prefetch = 0 : i64, scratch_operands = 0 : i64, tpu.core_type = #tpu.core_type<tc>, window_params = [{pipeline_mode = #tpu.pipeline_mode<synchronous>, transform_indices = @transform_0, window_bounds = array<i64: 2, 8, 512>}, {pipeline_mode = #tpu.pipeline_mode<synchronous>, transform_indices = @transform_1, window_bounds = array<i64: 2, 8, 512>}, {pipeline_mode = #tpu.pipeline_mode<synchronous>, transform_indices = @transform_2, window_bounds = array<i64: 3, 512>}, {pipeline_mode = #tpu.pipeline_mode<synchronous>, transform_indices = @transform_3, window_bounds = array<i64: 19, 144>}, {pipeline_mode = #tpu.pipeline_mode<synchronous>, transform_indices = @transform_4, window_bounds = array<i64: 8, 27>}, {pipeline_mode = #tpu.pipeline_mode<synchronous>, transform_indices = @transform_5, window_bounds = array<i64: 2, 8, 256>}]} {
    %0 = tpu.iota {dimensions = array<i32: 1>} : vector<1x512xi32>
    %c0_i32 = arith.constant 0 : i32
    %1 = vector.broadcast %c0_i32 : i32 to vector<1x512xi32>
    %2 = arith.addi %0, %1 : vector<1x512xi32>
    %c16_i32 = arith.constant 16 : i32
    %c0_i32_0 = arith.constant 0 : i32
    %3 = arith.cmpi eq, %c16_i32, %c0_i32_0 : i32
    %c1_i32 = arith.constant 1 : i32
    %4 = arith.select %3, %c1_i32, %c16_i32 : i32
    %5 = vector.broadcast %4 : i32 to vector<1x512xi32>
    %6 = arith.remsi %2, %5 : vector<1x512xi32>
    %c0_i32_1 = arith.constant 0 : i32
    %7 = vector.broadcast %c0_i32_1 : i32 to vector<1x512xi32>
    %8 = arith.cmpi ne, %6, %7 : vector<1x512xi32>
    %c0_i32_2 = arith.constant 0 : i32
    %9 = vector.broadcast %c0_i32_2 : i32 to vector<1x512xi32>
    %10 = arith.cmpi slt, %6, %9 : vector<1x512xi32>
    %c0_i32_3 = arith.constant 0 : i32
    %11 = arith.cmpi slt, %4, %c0_i32_3 : i32
    %12 = vector.broadcast %11 : i1 to vector<1x512xi1>
    %13 = vector.broadcast %12 : vector<1x512xi1> to vector<1x512xi1>
    %14 = arith.xori %10, %13 : vector<1x512xi1>
    %15 = arith.andi %14, %8 : vector<1x512xi1>
    %16 = vector.broadcast %4 : i32 to vector<1x512xi32>
    %17 = arith.addi %6, %16 : vector<1x512xi32>
    %18 = arith.select %15, %17, %6 : vector<1x512xi1>, vector<1x512xi32>
    %c15_i32 = arith.constant 15 : i32
    %19 = vector.broadcast %c15_i32 : i32 to vector<1x512xi32>
    %20 = arith.cmpi ne, %18, %19 : vector<1x512xi32>
    %c0_i32_4 = arith.constant 0 : i32
    %21 = vector.broadcast %c0_i32_4 : i32 to vector<1x512xi32>
    %22 = arith.cmpi ne, %18, %21 : vector<1x512xi32>
    %23 = vector.shape_cast %20 : vector<1x512xi1> to vector<1x512xi1>
    %24 = vector.broadcast %23 : vector<1x512xi1> to vector<8x512xi1>
    %25 = vector.shape_cast %22 : vector<1x512xi1> to vector<1x512xi1>
    %26 = vector.broadcast %25 : vector<1x512xi1> to vector<8x512xi1>
    %27 = vector.shape_cast %20 : vector<1x512xi1> to vector<1x512xi1>
    %28 = vector.broadcast %27 : vector<1x512xi1> to vector<3x512xi1>
    %29 = vector.shape_cast %22 : vector<1x512xi1> to vector<1x512xi1>
    %30 = vector.broadcast %29 : vector<1x512xi1> to vector<3x512xi1>
    %c0 = arith.constant 0 : index
    %c0_5 = arith.constant 0 : index
    %c0_6 = arith.constant 0 : index
    %31 = vector.load %arg1[%c0, %c0_5, %c0_6] : memref<2x8x512xbf16, #tpu.memory_space<vmem>>, vector<1x8x512xbf16>
    %32 = vector.shape_cast %31 : vector<1x8x512xbf16> to vector<8x512xbf16>
    %33 = arith.extf %32 : vector<8x512xbf16> to vector<8x512xf32>
    %c0_7 = arith.constant 0 : index
    %c0_8 = arith.constant 0 : index
    %c0_9 = arith.constant 0 : index
    %34 = vector.load %arg2[%c0_7, %c0_8, %c0_9] : memref<2x8x512xbf16, #tpu.memory_space<vmem>>, vector<1x8x512xbf16>
    %35 = vector.shape_cast %34 : vector<1x8x512xbf16> to vector<8x512xbf16>
    %36 = arith.extf %35 : vector<8x512xbf16> to vector<8x512xf32>
    %cst = arith.constant 0.000000e+00 : f32
    %37 = vector.broadcast %cst : f32 to vector<8x512xf32>
    %38 = arith.select %24, %33, %37 : vector<8x512xi1>, vector<8x512xf32>
    %cst_10 = arith.constant 0.000000e+00 : f32
    %39 = vector.broadcast %cst_10 : f32 to vector<8x512xf32>
    %40 = arith.select %26, %33, %39 : vector<8x512xi1>, vector<8x512xf32>
    %41 = vector.extract_strided_slice %38 {offsets = [0, 111], sizes = [8, 256], strides = [1, 1]} : vector<8x512xf32> to vector<8x256xf32>
    %42 = vector.extract_strided_slice %33 {offsets = [0, 112], sizes = [8, 256], strides = [1, 1]} : vector<8x512xf32> to vector<8x256xf32>
    %43 = vector.extract_strided_slice %40 {offsets = [0, 113], sizes = [8, 256], strides = [1, 1]} : vector<8x512xf32> to vector<8x256xf32>
    %44 = vector.extract_strided_slice %38 {offsets = [0, 127], sizes = [8, 256], strides = [1, 1]} : vector<8x512xf32> to vector<8x256xf32>
    %45 = vector.extract_strided_slice %33 {offsets = [0, 128], sizes = [8, 256], strides = [1, 1]} : vector<8x512xf32> to vector<8x256xf32>
    %46 = vector.extract_strided_slice %40 {offsets = [0, 129], sizes = [8, 256], strides = [1, 1]} : vector<8x512xf32> to vector<8x256xf32>
    %47 = vector.extract_strided_slice %38 {offsets = [0, 143], sizes = [8, 256], strides = [1, 1]} : vector<8x512xf32> to vector<8x256xf32>
    %48 = vector.extract_strided_slice %33 {offsets = [0, 144], sizes = [8, 256], strides = [1, 1]} : vector<8x512xf32> to vector<8x256xf32>
    %49 = vector.extract_strided_slice %40 {offsets = [0, 145], sizes = [8, 256], strides = [1, 1]} : vector<8x512xf32> to vector<8x256xf32>
    %cst_11 = arith.constant 0.000000e+00 : f32
    %50 = vector.broadcast %cst_11 : f32 to vector<8x512xf32>
    %51 = arith.select %24, %36, %50 : vector<8x512xi1>, vector<8x512xf32>
    %cst_12 = arith.constant 0.000000e+00 : f32
    %52 = vector.broadcast %cst_12 : f32 to vector<8x512xf32>
    %53 = arith.select %26, %36, %52 : vector<8x512xi1>, vector<8x512xf32>
    %54 = vector.extract_strided_slice %51 {offsets = [0, 111], sizes = [8, 256], strides = [1, 1]} : vector<8x512xf32> to vector<8x256xf32>
    %55 = vector.extract_strided_slice %36 {offsets = [0, 112], sizes = [8, 256], strides = [1, 1]} : vector<8x512xf32> to vector<8x256xf32>
    %56 = vector.extract_strided_slice %53 {offsets = [0, 113], sizes = [8, 256], strides = [1, 1]} : vector<8x512xf32> to vector<8x256xf32>
    %57 = vector.extract_strided_slice %51 {offsets = [0, 127], sizes = [8, 256], strides = [1, 1]} : vector<8x512xf32> to vector<8x256xf32>
    %58 = vector.extract_strided_slice %36 {offsets = [0, 128], sizes = [8, 256], strides = [1, 1]} : vector<8x512xf32> to vector<8x256xf32>
    %59 = vector.extract_strided_slice %53 {offsets = [0, 129], sizes = [8, 256], strides = [1, 1]} : vector<8x512xf32> to vector<8x256xf32>
    %60 = vector.extract_strided_slice %51 {offsets = [0, 143], sizes = [8, 256], strides = [1, 1]} : vector<8x512xf32> to vector<8x256xf32>
    %61 = vector.extract_strided_slice %36 {offsets = [0, 144], sizes = [8, 256], strides = [1, 1]} : vector<8x512xf32> to vector<8x256xf32>
    %62 = vector.extract_strided_slice %53 {offsets = [0, 145], sizes = [8, 256], strides = [1, 1]} : vector<8x512xf32> to vector<8x256xf32>
    %63 = tpu.concatenate %41, %42, %43, %44, %45, %46, %47, %48, %49, %54, %55, %56, %57, %58, %59, %60 in 0 : vector<8x256xf32>, vector<8x256xf32>, vector<8x256xf32>, vector<8x256xf32>, vector<8x256xf32>, vector<8x256xf32>, vector<8x256xf32>, vector<8x256xf32>, vector<8x256xf32>, vector<8x256xf32>, vector<8x256xf32>, vector<8x256xf32>, vector<8x256xf32>, vector<8x256xf32>, vector<8x256xf32>, vector<8x256xf32> -> vector<128x256xf32>
    %64 = tpu.concatenate %61, %62 in 0 : vector<8x256xf32>, vector<8x256xf32> -> vector<16x256xf32>
    %65 = tpu.concatenate %63, %64 in 0 : vector<128x256xf32>, vector<16x256xf32> -> vector<144x256xf32>
    %66 = vector.extract_strided_slice %33 {offsets = [0, 128], sizes = [8, 256], strides = [1, 1]} : vector<8x512xf32> to vector<8x256xf32>
    %c1 = arith.constant 1 : index
    %c0_13 = arith.constant 0 : index
    %c0_14 = arith.constant 0 : index
    %67 = vector.load %arg1[%c1, %c0_13, %c0_14] : memref<2x8x512xbf16, #tpu.memory_space<vmem>>, vector<1x8x512xbf16>
    %68 = vector.shape_cast %67 : vector<1x8x512xbf16> to vector<8x512xbf16>
    %69 = arith.extf %68 : vector<8x512xbf16> to vector<8x512xf32>
    %c1_15 = arith.constant 1 : index
    %c0_16 = arith.constant 0 : index
    %c0_17 = arith.constant 0 : index
    %70 = vector.load %arg2[%c1_15, %c0_16, %c0_17] : memref<2x8x512xbf16, #tpu.memory_space<vmem>>, vector<1x8x512xbf16>
    %71 = vector.shape_cast %70 : vector<1x8x512xbf16> to vector<8x512xbf16>
    %72 = arith.extf %71 : vector<8x512xbf16> to vector<8x512xf32>
    %cst_18 = arith.constant 0.000000e+00 : f32
    %73 = vector.broadcast %cst_18 : f32 to vector<8x512xf32>
    %74 = arith.select %24, %69, %73 : vector<8x512xi1>, vector<8x512xf32>
    %cst_19 = arith.constant 0.000000e+00 : f32
    %75 = vector.broadcast %cst_19 : f32 to vector<8x512xf32>
    %76 = arith.select %26, %69, %75 : vector<8x512xi1>, vector<8x512xf32>
    %77 = vector.extract_strided_slice %74 {offsets = [0, 111], sizes = [8, 256], strides = [1, 1]} : vector<8x512xf32> to vector<8x256xf32>
    %78 = vector.extract_strided_slice %69 {offsets = [0, 112], sizes = [8, 256], strides = [1, 1]} : vector<8x512xf32> to vector<8x256xf32>
    %79 = vector.extract_strided_slice %76 {offsets = [0, 113], sizes = [8, 256], strides = [1, 1]} : vector<8x512xf32> to vector<8x256xf32>
    %80 = vector.extract_strided_slice %74 {offsets = [0, 127], sizes = [8, 256], strides = [1, 1]} : vector<8x512xf32> to vector<8x256xf32>
    %81 = vector.extract_strided_slice %69 {offsets = [0, 128], sizes = [8, 256], strides = [1, 1]} : vector<8x512xf32> to vector<8x256xf32>
    %82 = vector.extract_strided_slice %76 {offsets = [0, 129], sizes = [8, 256], strides = [1, 1]} : vector<8x512xf32> to vector<8x256xf32>
    %83 = vector.extract_strided_slice %74 {offsets = [0, 143], sizes = [8, 256], strides = [1, 1]} : vector<8x512xf32> to vector<8x256xf32>
    %84 = vector.extract_strided_slice %69 {offsets = [0, 144], sizes = [8, 256], strides = [1, 1]} : vector<8x512xf32> to vector<8x256xf32>
    %85 = vector.extract_strided_slice %76 {offsets = [0, 145], sizes = [8, 256], strides = [1, 1]} : vector<8x512xf32> to vector<8x256xf32>
    %cst_20 = arith.constant 0.000000e+00 : f32
    %86 = vector.broadcast %cst_20 : f32 to vector<8x512xf32>
    %87 = arith.select %24, %72, %86 : vector<8x512xi1>, vector<8x512xf32>
    %cst_21 = arith.constant 0.000000e+00 : f32
    %88 = vector.broadcast %cst_21 : f32 to vector<8x512xf32>
    %89 = arith.select %26, %72, %88 : vector<8x512xi1>, vector<8x512xf32>
    %90 = vector.extract_strided_slice %87 {offsets = [0, 111], sizes = [8, 256], strides = [1, 1]} : vector<8x512xf32> to vector<8x256xf32>
    %91 = vector.extract_strided_slice %72 {offsets = [0, 112], sizes = [8, 256], strides = [1, 1]} : vector<8x512xf32> to vector<8x256xf32>
    %92 = vector.extract_strided_slice %89 {offsets = [0, 113], sizes = [8, 256], strides = [1, 1]} : vector<8x512xf32> to vector<8x256xf32>
    %93 = vector.extract_strided_slice %87 {offsets = [0, 127], sizes = [8, 256], strides = [1, 1]} : vector<8x512xf32> to vector<8x256xf32>
    %94 = vector.extract_strided_slice %72 {offsets = [0, 128], sizes = [8, 256], strides = [1, 1]} : vector<8x512xf32> to vector<8x256xf32>
    %95 = vector.extract_strided_slice %89 {offsets = [0, 129], sizes = [8, 256], strides = [1, 1]} : vector<8x512xf32> to vector<8x256xf32>
    %96 = vector.extract_strided_slice %87 {offsets = [0, 143], sizes = [8, 256], strides = [1, 1]} : vector<8x512xf32> to vector<8x256xf32>
    %97 = vector.extract_strided_slice %72 {offsets = [0, 144], sizes = [8, 256], strides = [1, 1]} : vector<8x512xf32> to vector<8x256xf32>
    %98 = vector.extract_strided_slice %89 {offsets = [0, 145], sizes = [8, 256], strides = [1, 1]} : vector<8x512xf32> to vector<8x256xf32>
    %99 = tpu.concatenate %77, %78, %79, %80, %81, %82, %83, %84, %85, %90, %91, %92, %93, %94, %95, %96 in 0 : vector<8x256xf32>, vector<8x256xf32>, vector<8x256xf32>, vector<8x256xf32>, vector<8x256xf32>, vector<8x256xf32>, vector<8x256xf32>, vector<8x256xf32>, vector<8x256xf32>, vector<8x256xf32>, vector<8x256xf32>, vector<8x256xf32>, vector<8x256xf32>, vector<8x256xf32>, vector<8x256xf32>, vector<8x256xf32> -> vector<128x256xf32>
    %100 = tpu.concatenate %97, %98 in 0 : vector<8x256xf32>, vector<8x256xf32> -> vector<16x256xf32>
    %101 = tpu.concatenate %99, %100 in 0 : vector<128x256xf32>, vector<16x256xf32> -> vector<144x256xf32>
    %102 = vector.extract_strided_slice %69 {offsets = [0, 128], sizes = [8, 256], strides = [1, 1]} : vector<8x512xf32> to vector<8x256xf32>
    %103 = tpu.concatenate %65, %101 in 1 : vector<144x256xf32>, vector<144x256xf32> -> vector<144x512xf32>
    %104 = arith.truncf %103 : vector<144x512xf32> to vector<144x512xbf16>
    %105 = tpu.concatenate %66, %102 in 1 : vector<8x256xf32>, vector<8x256xf32> -> vector<8x512xf32>
    %c0_22 = arith.constant 0 : index
    %c0_23 = arith.constant 0 : index
    %106 = vector.load %arg4[%c0_22, %c0_23] : memref<19x144xbf16, #tpu.memory_space<vmem>>, vector<19x144xbf16>
    %cst_24 = arith.constant dense<0.000000e+00> : vector<19x512xf32>
    %107 = tpu.matmul %106, %104, %cst_24 {dimension_numbers = #tpu.dot_dimension_numbers<[1], [0], [0], [1], [0, 0, 1, 1], [], []>} : vector<19x144xbf16>, vector<144x512xbf16>, vector<19x512xf32> -> vector<19x512xf32>
    %108 = vector.extract_strided_slice %107 {offsets = [0, 0], sizes = [8, 512], strides = [1, 1]} : vector<19x512xf32> to vector<8x512xf32>
    %109 = vector.extract_strided_slice %107 {offsets = [8, 0], sizes = [8, 512], strides = [1, 1]} : vector<19x512xf32> to vector<8x512xf32>
    %110 = vector.extract_strided_slice %107 {offsets = [16, 0], sizes = [3, 512], strides = [1, 1]} : vector<19x512xf32> to vector<3x512xf32>
    %c0_25 = arith.constant 0 : index
    %c0_26 = arith.constant 0 : index
    %111 = vector.load %arg3[%c0_25, %c0_26] : memref<3x512xbf16, #tpu.memory_space<vmem>>, vector<3x512xbf16>
    %112 = arith.extf %111 : vector<3x512xbf16> to vector<3x512xf32>
    %113 = arith.addf %110, %112 : vector<3x512xf32>
    %cst_27 = arith.constant 0.000000e+00 : f32
    %114 = vector.broadcast %cst_27 : f32 to vector<3x128xf32>
    %115 = vector.extract_strided_slice %113 {offsets = [0, 0], sizes = [3, 256], strides = [1, 1]} : vector<3x512xf32> to vector<3x256xf32>
    %116 = tpu.concatenate %114, %115, %114 in 1 : vector<3x128xf32>, vector<3x256xf32>, vector<3x128xf32> -> vector<3x512xf32>
    %cst_28 = arith.constant 0.000000e+00 : f32
    %117 = vector.broadcast %cst_28 : f32 to vector<3x512xf32>
    %118 = arith.select %28, %116, %117 : vector<3x512xi1>, vector<3x512xf32>
    %cst_29 = arith.constant 0.000000e+00 : f32
    %119 = vector.broadcast %cst_29 : f32 to vector<3x512xf32>
    %120 = arith.select %30, %116, %119 : vector<3x512xi1>, vector<3x512xf32>
    %121 = vector.extract_strided_slice %118 {offsets = [0, 111], sizes = [3, 256], strides = [1, 1]} : vector<3x512xf32> to vector<3x256xf32>
    %122 = vector.extract_strided_slice %116 {offsets = [0, 112], sizes = [3, 256], strides = [1, 1]} : vector<3x512xf32> to vector<3x256xf32>
    %123 = vector.extract_strided_slice %120 {offsets = [0, 113], sizes = [3, 256], strides = [1, 1]} : vector<3x512xf32> to vector<3x256xf32>
    %124 = vector.extract_strided_slice %118 {offsets = [0, 127], sizes = [3, 256], strides = [1, 1]} : vector<3x512xf32> to vector<3x256xf32>
    %125 = vector.extract_strided_slice %116 {offsets = [0, 128], sizes = [3, 256], strides = [1, 1]} : vector<3x512xf32> to vector<3x256xf32>
    %126 = vector.extract_strided_slice %120 {offsets = [0, 129], sizes = [3, 256], strides = [1, 1]} : vector<3x512xf32> to vector<3x256xf32>
    %127 = vector.extract_strided_slice %118 {offsets = [0, 143], sizes = [3, 256], strides = [1, 1]} : vector<3x512xf32> to vector<3x256xf32>
    %128 = vector.extract_strided_slice %116 {offsets = [0, 144], sizes = [3, 256], strides = [1, 1]} : vector<3x512xf32> to vector<3x256xf32>
    %129 = vector.extract_strided_slice %120 {offsets = [0, 145], sizes = [3, 256], strides = [1, 1]} : vector<3x512xf32> to vector<3x256xf32>
    %130 = tpu.concatenate %121, %122, %123, %124, %125, %126, %127, %128, %129 in 0 : vector<3x256xf32>, vector<3x256xf32>, vector<3x256xf32>, vector<3x256xf32>, vector<3x256xf32>, vector<3x256xf32>, vector<3x256xf32>, vector<3x256xf32>, vector<3x256xf32> -> vector<27x256xf32>
    %131 = vector.extract_strided_slice %113 {offsets = [0, 256], sizes = [3, 256], strides = [1, 1]} : vector<3x512xf32> to vector<3x256xf32>
    %132 = tpu.concatenate %114, %131, %114 in 1 : vector<3x128xf32>, vector<3x256xf32>, vector<3x128xf32> -> vector<3x512xf32>
    %cst_30 = arith.constant 0.000000e+00 : f32
    %133 = vector.broadcast %cst_30 : f32 to vector<3x512xf32>
    %134 = arith.select %28, %132, %133 : vector<3x512xi1>, vector<3x512xf32>
    %cst_31 = arith.constant 0.000000e+00 : f32
    %135 = vector.broadcast %cst_31 : f32 to vector<3x512xf32>
    %136 = arith.select %30, %132, %135 : vector<3x512xi1>, vector<3x512xf32>
    %137 = vector.extract_strided_slice %134 {offsets = [0, 111], sizes = [3, 256], strides = [1, 1]} : vector<3x512xf32> to vector<3x256xf32>
    %138 = vector.extract_strided_slice %132 {offsets = [0, 112], sizes = [3, 256], strides = [1, 1]} : vector<3x512xf32> to vector<3x256xf32>
    %139 = vector.extract_strided_slice %136 {offsets = [0, 113], sizes = [3, 256], strides = [1, 1]} : vector<3x512xf32> to vector<3x256xf32>
    %140 = vector.extract_strided_slice %134 {offsets = [0, 127], sizes = [3, 256], strides = [1, 1]} : vector<3x512xf32> to vector<3x256xf32>
    %141 = vector.extract_strided_slice %132 {offsets = [0, 128], sizes = [3, 256], strides = [1, 1]} : vector<3x512xf32> to vector<3x256xf32>
    %142 = vector.extract_strided_slice %136 {offsets = [0, 129], sizes = [3, 256], strides = [1, 1]} : vector<3x512xf32> to vector<3x256xf32>
    %143 = vector.extract_strided_slice %134 {offsets = [0, 143], sizes = [3, 256], strides = [1, 1]} : vector<3x512xf32> to vector<3x256xf32>
    %144 = vector.extract_strided_slice %132 {offsets = [0, 144], sizes = [3, 256], strides = [1, 1]} : vector<3x512xf32> to vector<3x256xf32>
    %145 = vector.extract_strided_slice %136 {offsets = [0, 145], sizes = [3, 256], strides = [1, 1]} : vector<3x512xf32> to vector<3x256xf32>
    %146 = tpu.concatenate %137, %138, %139, %140, %141, %142, %143, %144, %145 in 0 : vector<3x256xf32>, vector<3x256xf32>, vector<3x256xf32>, vector<3x256xf32>, vector<3x256xf32>, vector<3x256xf32>, vector<3x256xf32>, vector<3x256xf32>, vector<3x256xf32> -> vector<27x256xf32>
    %147 = tpu.concatenate %130, %146 in 1 : vector<27x256xf32>, vector<27x256xf32> -> vector<27x512xf32>
    %148 = arith.truncf %147 : vector<27x512xf32> to vector<27x512xbf16>
    %c0_32 = arith.constant 0 : index
    %c0_33 = arith.constant 0 : index
    %149 = vector.load %arg5[%c0_32, %c0_33] : memref<8x27xbf16, #tpu.memory_space<vmem>>, vector<8x27xbf16>
    %cst_34 = arith.constant dense<0.000000e+00> : vector<8x512xf32>
    %150 = tpu.matmul %149, %148, %cst_34 {dimension_numbers = #tpu.dot_dimension_numbers<[1], [0], [0], [1], [0, 0, 1, 1], [], []>} : vector<8x27xbf16>, vector<27x512xbf16>, vector<8x512xf32> -> vector<8x512xf32>
    %151 = arith.negf %150 : vector<8x512xf32>
    %152 = math.exp %151 : vector<8x512xf32>
    %cst_35 = arith.constant 1.000000e+00 : f32
    %153 = vector.broadcast %cst_35 : f32 to vector<8x512xf32>
    %154 = arith.addf %153, %152 : vector<8x512xf32>
    %155 = arith.divf %153, %154 : vector<8x512xf32>
    %156 = arith.mulf %108, %155 : vector<8x512xf32>
    %157 = arith.addf %156, %105 : vector<8x512xf32>
    %158 = arith.addf %157, %109 : vector<8x512xf32>
    %159 = vector.extract_strided_slice %158 {offsets = [0, 0], sizes = [8, 256], strides = [1, 1]} : vector<8x512xf32> to vector<8x256xf32>
    %c0_36 = arith.constant 0 : index
    %c0_37 = arith.constant 0 : index
    %c0_38 = arith.constant 0 : index
    %160 = vector.load %arg6[%c0_36, %c0_37, %c0_38] : memref<2x8x256xf32, #tpu.memory_space<vmem>>, vector<1x8x256xf32>
    %161 = vector.shape_cast %160 : vector<1x8x256xf32> to vector<8x256xf32>
    %162 = vector.shape_cast %159 : vector<8x256xf32> to vector<1x8x256xf32>
    tpu.vector_store %arg6[%c0_36, %c0_37, %c0_38], %162 {strides = array<i32>} : memref<2x8x256xf32, #tpu.memory_space<vmem>>, vector<1x8x256xf32>,
    %163 = vector.extract_strided_slice %158 {offsets = [0, 256], sizes = [8, 256], strides = [1, 1]} : vector<8x512xf32> to vector<8x256xf32>
    %c1_39 = arith.constant 1 : index
    %c0_40 = arith.constant 0 : index
    %c0_41 = arith.constant 0 : index
    %164 = vector.load %arg6[%c1_39, %c0_40, %c0_41] : memref<2x8x256xf32, #tpu.memory_space<vmem>>, vector<1x8x256xf32>
    %165 = vector.shape_cast %164 : vector<1x8x256xf32> to vector<8x256xf32>
    %166 = vector.shape_cast %163 : vector<8x256xf32> to vector<1x8x256xf32>
    tpu.vector_store %arg6[%c1_39, %c0_40, %c0_41], %166 {strides = array<i32>} : memref<2x8x256xf32, #tpu.memory_space<vmem>>, vector<1x8x256xf32>,
    return
  }
  func.func @transform_0(%arg0: i32) -> (i32, i32, i32) {
    %c0_i32 = arith.constant 0 : i32
    %c0_i32_0 = arith.constant 0 : i32
    %c0_i32_1 = arith.constant 0 : i32
    %c0_i32_2 = arith.constant 0 : i32
    return %c0_i32, %c0_i32_0, %c0_i32_1 : i32, i32, i32
  }
  func.func @transform_1(%arg0: i32) -> (i32, i32, i32) {
    %c0_i32 = arith.constant 0 : i32
    %c0_i32_0 = arith.constant 0 : i32
    %c0_i32_1 = arith.constant 0 : i32
    %c0_i32_2 = arith.constant 0 : i32
    return %c0_i32, %c0_i32_0, %c0_i32_1 : i32, i32, i32
  }
  func.func @transform_2(%arg0: i32) -> (i32, i32) {
    %c0_i32 = arith.constant 0 : i32
    %c0_i32_0 = arith.constant 0 : i32
    %c0_i32_1 = arith.constant 0 : i32
    return %c0_i32, %c0_i32_0 : i32, i32
  }
  func.func @transform_3(%arg0: i32) -> (i32, i32) {
    %c0_i32 = arith.constant 0 : i32
    %c0_i32_0 = arith.constant 0 : i32
    %c0_i32_1 = arith.constant 0 : i32
    return %c0_i32, %c0_i32_0 : i32, i32
  }
  func.func @transform_4(%arg0: i32) -> (i32, i32) {
    %c0_i32 = arith.constant 0 : i32
    %c0_i32_0 = arith.constant 0 : i32
    %c0_i32_1 = arith.constant 0 : i32
    return %c0_i32, %c0_i32_0 : i32, i32
  }
  func.func @transform_5(%arg0: i32) -> (i32, i32, i32) {
    %c0_i32 = arith.constant 0 : i32
    %c0_i32_0 = arith.constant 0 : i32
    %c0_i32_1 = arith.constant 0 : i32
    %c0_i32_2 = arith.constant 0 : i32
    return %c0_i32, %c0_i32_0, %c0_i32_1 : i32, i32, i32
  }
}

</mosaic_0001>

<llo_original>
// kernel: sam_forward.1
$region0: #{sam_forward.1}
  #allocation0 [shape = 'u32[]', space=smem, size = 0x4, offset = 0x4, fixed_abs, tag = 'smem constant byte address 0x4 - core index']
  #allocation1 [shape = 'u32[144,128]{1,0:T(1,128)}', space=vmem, size = 0x12000, scoped, tag = 'internal scratch']
  %s0 = inlined_call_operand.vmem [shape: bf16[2,8,512], index: 0, kind: input, shape index: {}]
  %s1 = inlined_call_operand.vmem [shape: bf16[2,8,512], index: 1, kind: input, shape index: {}]
  %s2 = inlined_call_operand.vmem [shape: bf16[3,512], index: 2, kind: input, shape index: {}]
  %s3 = inlined_call_operand.vmem [shape: bf16[19,144], index: 3, kind: input, shape index: {}]
  %s4 = inlined_call_operand.vmem [shape: bf16[8,27], index: 4, kind: input, shape index: {}]
  %s5 = inlined_call_operand.vmem [shape: f32[2,8,256], index: 5, kind: output, shape index: {}]
  %s6 = sld [smem:[#allocation0]]
  $region30: #{sam_forward.1} parent=0
    _
  %s8 = ssub.s32 1, %s6
  %s9 = scalar_select 0, %s8, %s6
  // Predicated region
  $region2: #{sam_forward.1} parent=0 // pred_check
    _
  $region3: #{sam_forward.1} parent=0 // pred_check_branch
    %11 = sbr.rel (0) target = $region5
  $region4: #{sam_forward.1} parent=0 // pred_region
    _
  $region5: #{sam_forward.1} parent=0 // pred_fallthru
    _
  // Predicated region
  $region6: #{sam_forward.1} parent=0 // pred_check
    _
  $region7: #{sam_forward.1} parent=0 // pred_check_branch
    %13 = sbr.rel (0) target = $region9
  $region8: #{sam_forward.1} parent=0 // pred_region
    _
  $region9: #{sam_forward.1} parent=0 // pred_fallthru
    _
  // Predicated region
  $region10: #{sam_forward.1} parent=0 // pred_check
    _
  $region11: #{sam_forward.1} parent=0 // pred_check_branch
    %15 = sbr.rel (0) target = $region13
  $region12: #{sam_forward.1} parent=0 // pred_region
    _
  $region13: #{sam_forward.1} parent=0 // pred_fallthru
    _
  // Predicated region
  $region14: #{sam_forward.1} parent=0 // pred_check
    _
  $region15: #{sam_forward.1} parent=0 // pred_check_branch
    %17 = sbr.rel (0) target = $region17
  $region16: #{sam_forward.1} parent=0 // pred_region
    _
  $region17: #{sam_forward.1} parent=0 // pred_fallthru
    _
  // Predicated region
  $region18: #{sam_forward.1} parent=0 // pred_check
    _
  $region19: #{sam_forward.1} parent=0 // pred_check_branch
    %19 = sbr.rel (0) target = $region21
  $region20: #{sam_forward.1} parent=0 // pred_region
    _
  $region21: #{sam_forward.1} parent=0 // pred_fallthru
    _
  %v21 = vlaneseq
  %v22 = vand.u32 %v21, 127
  %v23 = vadd.s32 %v22, 128
  %v24 = vadd.s32 %v22, 256
  %v25 = vadd.s32 %v22, 384
  %vm26 = vcmp.lt.s32.totalorder %v22, 0
  %v27 = vsub.s32 0, %v22
  %v28 = vsel %vm26, %v27, %v22
  %v29 = vshrl.u32 %v28, 4
  %v30 = vand.u32 %v28, 15
  %v31 = vsub.s32 0, %v30
  %v32 = vsel %vm26, %v31, %v30
  %vm33 = vcmp.lt.s32.totalorder %v23, 0
  %v34 = vsub.s32 0, %v23
  %v35 = vsel %vm33, %v34, %v23
  %v36 = vshrl.u32 %v35, 4
  %v37 = vand.u32 %v35, 15
  %v38 = vsub.s32 0, %v37
  %v39 = vsel %vm33, %v38, %v37
  %vm40 = vcmp.lt.s32.totalorder %v24, 0
  %v41 = vsub.s32 0, %v24
  %v42 = vsel %vm40, %v41, %v24
  %v43 = vshrl.u32 %v42, 4
  %v44 = vand.u32 %v42, 15
  %v45 = vsub.s32 0, %v44
  %v46 = vsel %vm40, %v45, %v44
  %vm47 = vcmp.lt.s32.totalorder %v25, 0
  %v48 = vsub.s32 0, %v25
  %v49 = vsel %vm47, %v48, %v25
  %v50 = vshrl.u32 %v49, 4
  %v51 = vand.u32 %v49, 15
  %v52 = vsub.s32 0, %v51
  %v53 = vsel %vm47, %v52, %v51
  %vm54 = vcmp.ne.s32.totalorder %v32, 0
  %vm55 = vcmp.ne.s32.totalorder %v39, 0
  %vm56 = vcmp.ne.s32.totalorder %v46, 0
  %vm57 = vcmp.ne.s32.totalorder %v53, 0
  %vm58 = vcmp.lt.s32.totalorder %v32, 0
  %vm59 = vcmp.lt.s32.totalorder %v39, 0
  %vm60 = vcmp.lt.s32.totalorder %v46, 0
  %vm61 = vcmp.lt.s32.totalorder %v53, 0
  %vm62 = vmand %vm58, %vm54
  %vm63 = vmand %vm59, %vm55
  %vm64 = vmand %vm60, %vm56
  %vm65 = vmand %vm61, %vm57
  %v66 = vadd.s32 %v32, 16
  %v67 = vadd.s32 %v39, 16
  %v68 = vadd.s32 %v46, 16
  %v69 = vadd.s32 %v53, 16
  %v70 = vsel %vm62, %v66, %v32
  %v71 = vsel %vm63, %v67, %v39
  %v72 = vsel %vm64, %v68, %v46
  %v73 = vsel %vm65, %v69, %v53
  %vm74 = vcmp.ne.s32.totalorder %v70, 15
  %vm75 = vcmp.ne.s32.totalorder %v71, 15
  %vm76 = vcmp.ne.s32.totalorder %v72, 15
  %vm77 = vcmp.ne.s32.totalorder %v73, 15
  %vm78 = vcmp.ne.s32.totalorder %v70, 0
  %vm79 = vcmp.ne.s32.totalorder %v71, 0
  %vm80 = vcmp.ne.s32.totalorder %v72, 0
  %vm81 = vcmp.ne.s32.totalorder %v73, 0
  %v82 = vsel %vm74, 1, 0
  %v83 = vsel %vm75, 1, 0
  %v84 = vsel %vm76, 1, 0
  %v85 = vsel %vm77, 1, 0
  %vm86 = vcmp.eq.s32.totalorder %v82, 1
  %vm87 = vcmp.eq.s32.totalorder %v83, 1
  %vm88 = vcmp.eq.s32.totalorder %v84, 1
  %vm89 = vcmp.eq.s32.totalorder %v85, 1
  %v90 = vsel %vm78, 1, 0
  %v91 = vsel %vm79, 1, 0
  %v92 = vsel %vm80, 1, 0
  %v93 = vsel %vm81, 1, 0
  %vm94 = vcmp.eq.s32.totalorder %v90, 1
  %vm95 = vcmp.eq.s32.totalorder %v91, 1
  %vm96 = vcmp.eq.s32.totalorder %v92, 1
  %vm97 = vcmp.eq.s32.totalorder %v93, 1
  %v98 = vld [vmem:[%s0] sm:$0xff]
  %v99 = vld [vmem:[%s0 + $0x8] sm:$0xff]
  %v100 = vunpack.c.l.bf16 %v98
  %v101 = vunpack.c.h.bf16 %v98
  %v102 = vunpack.c.l.bf16 %v99
  %v103 = vunpack.c.h.bf16 %v99
  %v104 = vld [vmem:[%s1] sm:$0xff]
  %v105 = vld [vmem:[%s1 + $0x8] sm:$0xff]
  %v106 = vunpack.c.l.bf16 %v104
  %v107 = vunpack.c.h.bf16 %v104
  %v108 = vunpack.c.l.bf16 %v105
  %v109 = vunpack.c.h.bf16 %v105
  %v110 = vsel %vm86, %v100, 0.0
  %v111 = vsel %vm87, %v101, 0.0
  %v112 = vsel %vm88, %v102, 0.0
  %v113 = vsel %vm89, %v103, 0.0
  %v114 = vsel %vm94, %v100, 0.0
  %v115 = vsel %vm95, %v101, 0.0
  %v116 = vsel %vm96, %v102, 0.0
  %v117 = vsel %vm97, %v103, 0.0
  %v118 = vsel %vm86, %v106, 0.0
  %v119 = vsel %vm87, %v107, 0.0
  %v120 = vsel %vm88, %v108, 0.0
  %v121 = vsel %vm89, %v109, 0.0
  %v122 = vsel %vm94, %v106, 0.0
  %v123 = vsel %vm95, %v107, 0.0
  %v124 = vsel %vm96, %v108, 0.0
  %v125 = vsel %vm97, %v109, 0.0
  %129 = vrot.lane.b32.xlu0 %v100, 127
  %v130 = vpop.permute.xlu0 %129
  %131 = vrot.lane.b32.xlu0 %v101, 127
  %v132 = vpop.permute.xlu0 %131
  %133 = vrot.lane.b32.xlu0 %v102, 127
  %v134 = vpop.permute.xlu0 %133
  %vm135 = vcmask 1039360
  %v136 = vsel %vm135, %v130, %v132
  %v137 = vsel %vm135, %v132, %v134
  %141 = vrot.lane.b32.xlu0 %v114, 126
  %v142 = vpop.permute.xlu0 %141
  %143 = vrot.lane.b32.xlu0 %v115, 126
  %v144 = vpop.permute.xlu0 %143
  %145 = vrot.lane.b32.xlu0 %v116, 126
  %v146 = vpop.permute.xlu0 %145
  %vm147 = vcmask 1031168
  %v148 = vsel %vm147, %v142, %v144
  %v149 = vsel %vm147, %v144, %v146
  %153 = vrot.lane.b32.xlu0 %v110, 112
  %v154 = vpop.permute.xlu0 %153
  %155 = vrot.lane.b32.xlu0 %v111, 112
  %v156 = vpop.permute.xlu0 %155
  %157 = vrot.lane.b32.xlu0 %v112, 112
  %v158 = vpop.permute.xlu0 %157
  %vm159 = vcmask 916480
  %v160 = vsel %vm159, %v154, %v156
  %v161 = vsel %vm159, %v156, %v158
  %162 = vrot.lane.b32.xlu0 %v101, 111
  %v163 = vpop.permute.xlu0 %162
  %164 = vrot.lane.b32.xlu0 %v102, 111
  %v165 = vpop.permute.xlu0 %164
  %vm166 = vcmask 908288
  %v167 = vsel %vm166, %v163, %v165
  %169 = vrot.lane.b32.xlu0 %v115, 110
  %v170 = vpop.permute.xlu0 %169
  %171 = vrot.lane.b32.xlu0 %v116, 110
  %v172 = vpop.permute.xlu0 %171
  %173 = vrot.lane.b32.xlu0 %v117, 110
  %v174 = vpop.permute.xlu0 %173
  %vm175 = vcmask 900096
  %v176 = vsel %vm175, %v170, %v172
  %v177 = vsel %vm175, %v172, %v174
  %179 = vrot.lane.b32.xlu0 %v111, 96
  %v180 = vpop.permute.xlu0 %179
  %181 = vrot.lane.b32.xlu0 %v112, 96
  %v182 = vpop.permute.xlu0 %181
  %183 = vrot.lane.b32.xlu0 %v113, 96
  %v184 = vpop.permute.xlu0 %183
  %vm185 = vcmask 785408
  %v186 = vsel %vm185, %v180, %v182
  %v187 = vsel %vm185, %v182, %v184
  %189 = vrot.lane.b32.xlu0 %v101, 95
  %v190 = vpop.permute.xlu0 %189
  %191 = vrot.lane.b32.xlu0 %v102, 95
  %v192 = vpop.permute.xlu0 %191
  %193 = vrot.lane.b32.xlu0 %v103, 95
  %v194 = vpop.permute.xlu0 %193
  %vm195 = vcmask 777216
  %v196 = vsel %vm195, %v190, %v192
  %v197 = vsel %vm195, %v192, %v194
  %198 = vrot.lane.b32.xlu0 %v115, 94
  %v199 = vpop.permute.xlu0 %198
  %200 = vrot.lane.b32.xlu0 %v116, 94
  %v201 = vpop.permute.xlu0 %200
  %202 = vrot.lane.b32.xlu0 %v117, 94
  %v203 = vpop.permute.xlu0 %202
  %vm204 = vcmask 769024
  %v205 = vsel %vm204, %v199, %v201
  %v206 = vsel %vm204, %v201, %v203
  %210 = vrot.lane.b32.xlu0 %v106, 127
  %v211 = vpop.permute.xlu0 %210
  %212 = vrot.lane.b32.xlu0 %v107, 127
  %v213 = vpop.permute.xlu0 %212
  %214 = vrot.lane.b32.xlu0 %v108, 127
  %v215 = vpop.permute.xlu0 %214
  %v216 = vsel %vm135, %v211, %v213
  %v217 = vsel %vm135, %v213, %v215
  %221 = vrot.lane.b32.xlu0 %v122, 126
  %v222 = vpop.permute.xlu0 %221
  %223 = vrot.lane.b32.xlu0 %v123, 126
  %v224 = vpop.permute.xlu0 %223
  %225 = vrot.lane.b32.xlu0 %v124, 126
  %v226 = vpop.permute.xlu0 %225
  %v227 = vsel %vm147, %v222, %v224
  %v228 = vsel %vm147, %v224, %v226
  %232 = vrot.lane.b32.xlu0 %v118, 112
  %v233 = vpop.permute.xlu0 %232
  %234 = vrot.lane.b32.xlu0 %v119, 112
  %v235 = vpop.permute.xlu0 %234
  %236 = vrot.lane.b32.xlu0 %v120, 112
  %v237 = vpop.permute.xlu0 %236
  %v238 = vsel %vm159, %v233, %v235
  %v239 = vsel %vm159, %v235, %v237
  %240 = vrot.lane.b32.xlu0 %v107, 111
  %v241 = vpop.permute.xlu0 %240
  %242 = vrot.lane.b32.xlu0 %v108, 111
  %v243 = vpop.permute.xlu0 %242
  %v244 = vsel %vm166, %v241, %v243
  %246 = vrot.lane.b32.xlu0 %v123, 110
  %v247 = vpop.permute.xlu0 %246
  %248 = vrot.lane.b32.xlu0 %v124, 110
  %v249 = vpop.permute.xlu0 %248
  %250 = vrot.lane.b32.xlu0 %v125, 110
  %v251 = vpop.permute.xlu0 %250
  %v252 = vsel %vm175, %v247, %v249
  %v253 = vsel %vm175, %v249, %v251
  %255 = vrot.lane.b32.xlu0 %v119, 96
  %v256 = vpop.permute.xlu0 %255
  %257 = vrot.lane.b32.xlu0 %v120, 96
  %v258 = vpop.permute.xlu0 %257
  %259 = vrot.lane.b32.xlu0 %v121, 96
  %v260 = vpop.permute.xlu0 %259
  %v261 = vsel %vm185, %v256, %v258
  %v262 = vsel %vm185, %v258, %v260
  %263 = vrot.lane.b32.xlu0 %v123, 127
  %v264 = vpop.permute.xlu0 %263
  %265 = vrot.lane.b32.xlu0 %v124, 127
  %v266 = vpop.permute.xlu0 %265
  %267 = vrot.lane.b32.xlu0 %v125, 127
  %v268 = vpop.permute.xlu0 %267
  %v269 = vsel %vm135, %v264, %v266
  %v270 = vsel %vm135, %v266, %v268
  %272 = vrot.lane.b32.xlu0 %v107, 95
  %v273 = vpop.permute.xlu0 %272
  %274 = vrot.lane.b32.xlu0 %v108, 95
  %v275 = vpop.permute.xlu0 %274
  %276 = vrot.lane.b32.xlu0 %v109, 95
  %v277 = vpop.permute.xlu0 %276
  %278 = vrot.lane.b32.xlu0 %v269, 95
  %v279 = vpop.permute.xlu0 %278
  %280 = vrot.lane.b32.xlu0 %v270, 95
  %v281 = vpop.permute.xlu0 %280
  %282 = vrot.lane.b32.xlu0 %v268, 95
  %v283 = vpop.permute.xlu0 %282
  %v284 = vsel %vm195, %v273, %v275
  %v285 = vsel %vm195, %v275, %v277
  %v286 = vsel %vm195, %v279, %v281
  %v287 = vsel %vm195, %v281, %v283
  %s288 = scalar_lea.vmem %s0, 16
  %v289 = vld [vmem:[%s288] sm:$0xff]
  %v290 = vld [vmem:[%s288 + $0x8] sm:$0xff]
  %v291 = vunpack.c.l.bf16 %v289
  %v292 = vunpack.c.h.bf16 %v289
  %v293 = vunpack.c.l.bf16 %v290
  %v294 = vunpack.c.h.bf16 %v290
  %s295 = scalar_lea.vmem %s1, 16
  %v296 = vld [vmem:[%s295] sm:$0xff]
  %v297 = vld [vmem:[%s295 + $0x8] sm:$0xff]
  %v298 = vunpack.c.l.bf16 %v296
  %v299 = vunpack.c.h.bf16 %v296
  %v300 = vunpack.c.l.bf16 %v297
  %v301 = vunpack.c.h.bf16 %v297
  %v302 = vsel %vm86, %v291, 0.0
  %v303 = vsel %vm87, %v292, 0.0
  %v304 = vsel %vm88, %v293, 0.0
  %v305 = vsel %vm89, %v294, 0.0
  %v306 = vsel %vm94, %v291, 0.0
  %v307 = vsel %vm95, %v292, 0.0
  %v308 = vsel %vm96, %v293, 0.0
  %v309 = vsel %vm97, %v294, 0.0
  %v310 = vsel %vm86, %v298, 0.0
  %v311 = vsel %vm87, %v299, 0.0
  %v312 = vsel %vm88, %v300, 0.0
  %v313 = vsel %vm89, %v301, 0.0
  %v314 = vsel %vm94, %v298, 0.0
  %v315 = vsel %vm95, %v299, 0.0
  %v316 = vsel %vm96, %v300, 0.0
  %v317 = vsel %vm97, %v301, 0.0
  %321 = vrot.lane.b32.xlu0 %v291, 127
  %v322 = vpop.permute.xlu0 %321
  %323 = vrot.lane.b32.xlu0 %v292, 127
  %v324 = vpop.permute.xlu0 %323
  %325 = vrot.lane.b32.xlu0 %v293, 127
  %v326 = vpop.permute.xlu0 %325
  %v327 = vsel %vm135, %v322, %v324
  %v328 = vsel %vm135, %v324, %v326
  %332 = vrot.lane.b32.xlu0 %v306, 126
  %v333 = vpop.permute.xlu0 %332
  %334 = vrot.lane.b32.xlu0 %v307, 126
  %v335 = vpop.permute.xlu0 %334
  %336 = vrot.lane.b32.xlu0 %v308, 126
  %v337 = vpop.permute.xlu0 %336
  %v338 = vsel %vm147, %v333, %v335
  %v339 = vsel %vm147, %v335, %v337
  %343 = vrot.lane.b32.xlu0 %v302, 112
  %v344 = vpop.permute.xlu0 %343
  %345 = vrot.lane.b32.xlu0 %v303, 112
  %v346 = vpop.permute.xlu0 %345
  %347 = vrot.lane.b32.xlu0 %v304, 112
  %v348 = vpop.permute.xlu0 %347
  %v349 = vsel %vm159, %v344, %v346
  %v350 = vsel %vm159, %v346, %v348
  %351 = vrot.lane.b32.xlu0 %v292, 111
  %v352 = vpop.permute.xlu0 %351
  %353 = vrot.lane.b32.xlu0 %v293, 111
  %v354 = vpop.permute.xlu0 %353
  %v355 = vsel %vm166, %v352, %v354
  %357 = vrot.lane.b32.xlu0 %v307, 110
  %v358 = vpop.permute.xlu0 %357
  %359 = vrot.lane.b32.xlu0 %v308, 110
  %v360 = vpop.permute.xlu0 %359
  %361 = vrot.lane.b32.xlu0 %v309, 110
  %v362 = vpop.permute.xlu0 %361
  %v363 = vsel %vm175, %v358, %v360
  %v364 = vsel %vm175, %v360, %v362
  %366 = vrot.lane.b32.xlu0 %v303, 96
  %v367 = vpop.permute.xlu0 %366
  %368 = vrot.lane.b32.xlu0 %v304, 96
  %v369 = vpop.permute.xlu0 %368
  %370 = vrot.lane.b32.xlu0 %v305, 96
  %v371 = vpop.permute.xlu0 %370
  %v372 = vsel %vm185, %v367, %v369
  %v373 = vsel %vm185, %v369, %v371
  %375 = vrot.lane.b32.xlu0 %v292, 95
  %v376 = vpop.permute.xlu0 %375
  %377 = vrot.lane.b32.xlu0 %v293, 95
  %v378 = vpop.permute.xlu0 %377
  %379 = vrot.lane.b32.xlu0 %v294, 95
  %v380 = vpop.permute.xlu0 %379
  %v381 = vsel %vm195, %v376, %v378
  %v382 = vsel %vm195, %v378, %v380
  %383 = vrot.lane.b32.xlu0 %v307, 94
  %v384 = vpop.permute.xlu0 %383
  %385 = vrot.lane.b32.xlu0 %v308, 94
  %v386 = vpop.permute.xlu0 %385
  %387 = vrot.lane.b32.xlu0 %v309, 94
  %v388 = vpop.permute.xlu0 %387
  %v389 = vsel %vm204, %v384, %v386
  %v390 = vsel %vm204, %v386, %v388
  %394 = vrot.lane.b32.xlu0 %v298, 127
  %v395 = vpop.permute.xlu0 %394
  %396 = vrot.lane.b32.xlu0 %v299, 127
  %v397 = vpop.permute.xlu0 %396
  %398 = vrot.lane.b32.xlu0 %v300, 127
  %v399 = vpop.permute.xlu0 %398
  %v400 = vsel %vm135, %v395, %v397
  %v401 = vsel %vm135, %v397, %v399
  %405 = vrot.lane.b32.xlu0 %v314, 126
  %v406 = vpop.permute.xlu0 %405
  %407 = vrot.lane.b32.xlu0 %v315, 126
  %v408 = vpop.permute.xlu0 %407
  %409 = vrot.lane.b32.xlu0 %v316, 126
  %v410 = vpop.permute.xlu0 %409
  %v411 = vsel %vm147, %v406, %v408
  %v412 = vsel %vm147, %v408, %v410
  %416 = vrot.lane.b32.xlu0 %v310, 112
  %v417 = vpop.permute.xlu0 %416
  %418 = vrot.lane.b32.xlu0 %v311, 112
  %v419 = vpop.permute.xlu0 %418
  %420 = vrot.lane.b32.xlu0 %v312, 112
  %v421 = vpop.permute.xlu0 %420
  %v422 = vsel %vm159, %v417, %v419
  %v423 = vsel %vm159, %v419, %v421
  %424 = vrot.lane.b32.xlu0 %v299, 111
  %v425 = vpop.permute.xlu0 %424
  %426 = vrot.lane.b32.xlu0 %v300, 111
  %v427 = vpop.permute.xlu0 %426
  %v428 = vsel %vm166, %v425, %v427
  %430 = vrot.lane.b32.xlu0 %v315, 110
  %v431 = vpop.permute.xlu0 %430
  %432 = vrot.lane.b32.xlu0 %v316, 110
  %v433 = vpop.permute.xlu0 %432
  %434 = vrot.lane.b32.xlu0 %v317, 110
  %v435 = vpop.permute.xlu0 %434
  %v436 = vsel %vm175, %v431, %v433
  %v437 = vsel %vm175, %v433, %v435
  %439 = vrot.lane.b32.xlu0 %v311, 96
  %v440 = vpop.permute.xlu0 %439
  %441 = vrot.lane.b32.xlu0 %v312, 96
  %v442 = vpop.permute.xlu0 %441
  %443 = vrot.lane.b32.xlu0 %v313, 96
  %v444 = vpop.permute.xlu0 %443
  %v445 = vsel %vm185, %v440, %v442
  %v446 = vsel %vm185, %v442, %v444
  %447 = vrot.lane.b32.xlu0 %v315, 127
  %v448 = vpop.permute.xlu0 %447
  %449 = vrot.lane.b32.xlu0 %v316, 127
  %v450 = vpop.permute.xlu0 %449
  %451 = vrot.lane.b32.xlu0 %v317, 127
  %v452 = vpop.permute.xlu0 %451
  %v453 = vsel %vm135, %v448, %v450
  %v454 = vsel %vm135, %v450, %v452
  %456 = vrot.lane.b32.xlu0 %v299, 95
  %v457 = vpop.permute.xlu0 %456
  %458 = vrot.lane.b32.xlu0 %v300, 95
  %v459 = vpop.permute.xlu0 %458
  %460 = vrot.lane.b32.xlu0 %v301, 95
  %v461 = vpop.permute.xlu0 %460
  %462 = vrot.lane.b32.xlu0 %v453, 95
  %v463 = vpop.permute.xlu0 %462
  %464 = vrot.lane.b32.xlu0 %v454, 95
  %v465 = vpop.permute.xlu0 %464
  %466 = vrot.lane.b32.xlu0 %v452, 95
  %v467 = vpop.permute.xlu0 %466
  %v468 = vsel %vm195, %v457, %v459
  %v469 = vsel %vm195, %v459, %v461
  %v470 = vsel %vm195, %v463, %v465
  %v471 = vsel %vm195, %v465, %v467
  %472 = vrot.lane.b32.xlu0 %v110, 17
  %v473 = vpop.permute.xlu0 %472
  %474 = vrot.lane.b32.xlu0 %v111, 17
  %v475 = vpop.permute.xlu0 %474
  %476 = vrot.lane.b32.xlu0 %v112, 17
  %v477 = vpop.permute.xlu0 %476
  %478 = vrot.lane.b32.xlu0 %v136, 17
  %v479 = vpop.permute.xlu0 %478
  %480 = vrot.lane.b32.xlu0 %v137, 17
  %v481 = vpop.permute.xlu0 %480
  %482 = vrot.lane.b32.xlu0 %v134, 17
  %v483 = vpop.permute.xlu0 %482
  %484 = vrot.lane.b32.xlu0 %v148, 17
  %v485 = vpop.permute.xlu0 %484
  %486 = vrot.lane.b32.xlu0 %v149, 17
  %v487 = vpop.permute.xlu0 %486
  %488 = vrot.lane.b32.xlu0 %v146, 17
  %v489 = vpop.permute.xlu0 %488
  %490 = vrot.lane.b32.xlu0 %v160, 17
  %v491 = vpop.permute.xlu0 %490
  %492 = vrot.lane.b32.xlu0 %v161, 17
  %v493 = vpop.permute.xlu0 %492
  %494 = vrot.lane.b32.xlu0 %v158, 17
  %v495 = vpop.permute.xlu0 %494
  %496 = vrot.lane.b32.xlu0 %v163, 17
  %v497 = vpop.permute.xlu0 %496
  %498 = vrot.lane.b32.xlu0 %v167, 17
  %v499 = vpop.permute.xlu0 %498
  %500 = vrot.lane.b32.xlu0 %v165, 17
  %v501 = vpop.permute.xlu0 %500
  %502 = vrot.lane.b32.xlu0 %v170, 17
  %v503 = vpop.permute.xlu0 %502
  %504 = vrot.lane.b32.xlu0 %v176, 17
  %v505 = vpop.permute.xlu0 %504
  %506 = vrot.lane.b32.xlu0 %v177, 17
  %v507 = vpop.permute.xlu0 %506
  %508 = vrot.lane.b32.xlu0 %v180, 17
  %v509 = vpop.permute.xlu0 %508
  %510 = vrot.lane.b32.xlu0 %v186, 17
  %v511 = vpop.permute.xlu0 %510
  %512 = vrot.lane.b32.xlu0 %v187, 17
  %v513 = vpop.permute.xlu0 %512
  %514 = vrot.lane.b32.xlu0 %v190, 17
  %v515 = vpop.permute.xlu0 %514
  %516 = vrot.lane.b32.xlu0 %v196, 17
  %v517 = vpop.permute.xlu0 %516
  %518 = vrot.lane.b32.xlu0 %v197, 17
  %v519 = vpop.permute.xlu0 %518
  %520 = vrot.lane.b32.xlu0 %v199, 17
  %v521 = vpop.permute.xlu0 %520
  %522 = vrot.lane.b32.xlu0 %v205, 17
  %v523 = vpop.permute.xlu0 %522
  %524 = vrot.lane.b32.xlu0 %v206, 17
  %v525 = vpop.permute.xlu0 %524
  %526 = vrot.lane.b32.xlu0 %v118, 17
  %v527 = vpop.permute.xlu0 %526
  %528 = vrot.lane.b32.xlu0 %v119, 17
  %v529 = vpop.permute.xlu0 %528
  %530 = vrot.lane.b32.xlu0 %v120, 17
  %v531 = vpop.permute.xlu0 %530
  %532 = vrot.lane.b32.xlu0 %v216, 17
  %v533 = vpop.permute.xlu0 %532
  %534 = vrot.lane.b32.xlu0 %v217, 17
  %v535 = vpop.permute.xlu0 %534
  %536 = vrot.lane.b32.xlu0 %v215, 17
  %v537 = vpop.permute.xlu0 %536
  %538 = vrot.lane.b32.xlu0 %v227, 17
  %v539 = vpop.permute.xlu0 %538
  %540 = vrot.lane.b32.xlu0 %v228, 17
  %v541 = vpop.permute.xlu0 %540
  %542 = vrot.lane.b32.xlu0 %v226, 17
  %v543 = vpop.permute.xlu0 %542
  %544 = vrot.lane.b32.xlu0 %v238, 17
  %v545 = vpop.permute.xlu0 %544
  %546 = vrot.lane.b32.xlu0 %v239, 17
  %v547 = vpop.permute.xlu0 %546
  %548 = vrot.lane.b32.xlu0 %v237, 17
  %v549 = vpop.permute.xlu0 %548
  %550 = vrot.lane.b32.xlu0 %v241, 17
  %v551 = vpop.permute.xlu0 %550
  %552 = vrot.lane.b32.xlu0 %v244, 17
  %v553 = vpop.permute.xlu0 %552
  %554 = vrot.lane.b32.xlu0 %v243, 17
  %v555 = vpop.permute.xlu0 %554
  %556 = vrot.lane.b32.xlu0 %v247, 17
  %v557 = vpop.permute.xlu0 %556
  %558 = vrot.lane.b32.xlu0 %v252, 17
  %v559 = vpop.permute.xlu0 %558
  %560 = vrot.lane.b32.xlu0 %v253, 17
  %v561 = vpop.permute.xlu0 %560
  %562 = vrot.lane.b32.xlu0 %v256, 17
  %v563 = vpop.permute.xlu0 %562
  %564 = vrot.lane.b32.xlu0 %v261, 17
  %v565 = vpop.permute.xlu0 %564
  %566 = vrot.lane.b32.xlu0 %v262, 17
  %v567 = vpop.permute.xlu0 %566
  %568 = vrot.lane.b32.xlu0 %v273, 17
  %v569 = vpop.permute.xlu0 %568
  %570 = vrot.lane.b32.xlu0 %v284, 17
  %v571 = vpop.permute.xlu0 %570
  %572 = vrot.lane.b32.xlu0 %v285, 17
  %v573 = vpop.permute.xlu0 %572
  %574 = vrot.lane.b32.xlu0 %v279, 17
  %v575 = vpop.permute.xlu0 %574
  %576 = vrot.lane.b32.xlu0 %v286, 17
  %v577 = vpop.permute.xlu0 %576
  %578 = vrot.lane.b32.xlu0 %v287, 17
  %v579 = vpop.permute.xlu0 %578
  %vm580 = vcmask 138240
  %v581 = vsel %vm580, %v473, %v475
  %v582 = vsel %vm580, %v475, %v477
  %v583 = vsel %vm580, %v479, %v481
  %v584 = vsel %vm580, %v481, %v483
  %v585 = vsel %vm580, %v485, %v487
  %v586 = vsel %vm580, %v487, %v489
  %v587 = vsel %vm580, %v491, %v493
  %v588 = vsel %vm580, %v493, %v495
  %v589 = vsel %vm580, %v497, %v499
  %v590 = vsel %vm580, %v499, %v501
  %v591 = vsel %vm580, %v503, %v505
  %v592 = vsel %vm580, %v505, %v507
  %v593 = vsel %vm580, %v509, %v511
  %v594 = vsel %vm580, %v511, %v513
  %v595 = vsel %vm580, %v515, %v517
  %v596 = vsel %vm580, %v517, %v519
  %v597 = vsel %vm580, %v521, %v523
  %v598 = vsel %vm580, %v523, %v525
  %v599 = vsel %vm580, %v527, %v529
  %v600 = vsel %vm580, %v529, %v531
  %v601 = vsel %vm580, %v533, %v535
  %v602 = vsel %vm580, %v535, %v537
  %v603 = vsel %vm580, %v539, %v541
  %v604 = vsel %vm580, %v541, %v543
  %v605 = vsel %vm580, %v545, %v547
  %v606 = vsel %vm580, %v547, %v549
  %v607 = vsel %vm580, %v551, %v553
  %v608 = vsel %vm580, %v553, %v555
  %v609 = vsel %vm580, %v557, %v559
  %v610 = vsel %vm580, %v559, %v561
  %v611 = vsel %vm580, %v563, %v565
  %v612 = vsel %vm580, %v565, %v567
  %v613 = vsel %vm580, %v569, %v571
  %v614 = vsel %vm580, %v571, %v573
  %v615 = vsel %vm580, %v575, %v577
  %v616 = vsel %vm580, %v577, %v579
  %653 = vrot.lane.b32.xlu0 %v302, 17
  %v654 = vpop.permute.xlu0 %653
  %655 = vrot.lane.b32.xlu0 %v303, 17
  %v656 = vpop.permute.xlu0 %655
  %657 = vrot.lane.b32.xlu0 %v304, 17
  %v658 = vpop.permute.xlu0 %657
  %659 = vrot.lane.b32.xlu0 %v327, 17
  %v660 = vpop.permute.xlu0 %659
  %661 = vrot.lane.b32.xlu0 %v328, 17
  %v662 = vpop.permute.xlu0 %661
  %663 = vrot.lane.b32.xlu0 %v326, 17
  %v664 = vpop.permute.xlu0 %663
  %665 = vrot.lane.b32.xlu0 %v338, 17
  %v666 = vpop.permute.xlu0 %665
  %667 = vrot.lane.b32.xlu0 %v339, 17
  %v668 = vpop.permute.xlu0 %667
  %669 = vrot.lane.b32.xlu0 %v337, 17
  %v670 = vpop.permute.xlu0 %669
  %671 = vrot.lane.b32.xlu0 %v349, 17
  %v672 = vpop.permute.xlu0 %671
  %673 = vrot.lane.b32.xlu0 %v350, 17
  %v674 = vpop.permute.xlu0 %673
  %675 = vrot.lane.b32.xlu0 %v348, 17
  %v676 = vpop.permute.xlu0 %675
  %677 = vrot.lane.b32.xlu0 %v352, 17
  %v678 = vpop.permute.xlu0 %677
  %679 = vrot.lane.b32.xlu0 %v355, 17
  %v680 = vpop.permute.xlu0 %679
  %681 = vrot.lane.b32.xlu0 %v354, 17
  %v682 = vpop.permute.xlu0 %681
  %683 = vrot.lane.b32.xlu0 %v358, 17
  %v684 = vpop.permute.xlu0 %683
  %685 = vrot.lane.b32.xlu0 %v363, 17
  %v686 = vpop.permute.xlu0 %685
  %687 = vrot.lane.b32.xlu0 %v364, 17
  %v688 = vpop.permute.xlu0 %687
  %689 = vrot.lane.b32.xlu0 %v367, 17
  %v690 = vpop.permute.xlu0 %689
  %691 = vrot.lane.b32.xlu0 %v372, 17
  %v692 = vpop.permute.xlu0 %691
  %693 = vrot.lane.b32.xlu0 %v373, 17
  %v694 = vpop.permute.xlu0 %693
  %695 = vrot.lane.b32.xlu0 %v376, 17
  %v696 = vpop.permute.xlu0 %695
  %697 = vrot.lane.b32.xlu0 %v381, 17
  %v698 = vpop.permute.xlu0 %697
  %699 = vrot.lane.b32.xlu0 %v382, 17
  %v700 = vpop.permute.xlu0 %699
  %701 = vrot.lane.b32.xlu0 %v384, 17
  %v702 = vpop.permute.xlu0 %701
  %703 = vrot.lane.b32.xlu0 %v389, 17
  %v704 = vpop.permute.xlu0 %703
  %705 = vrot.lane.b32.xlu0 %v390, 17
  %v706 = vpop.permute.xlu0 %705
  %707 = vrot.lane.b32.xlu0 %v310, 17
  %v708 = vpop.permute.xlu0 %707
  %709 = vrot.lane.b32.xlu0 %v311, 17
  %v710 = vpop.permute.xlu0 %709
  %711 = vrot.lane.b32.xlu0 %v312, 17
  %v712 = vpop.permute.xlu0 %711
  %713 = vrot.lane.b32.xlu0 %v400, 17
  %v714 = vpop.permute.xlu0 %713
  %715 = vrot.lane.b32.xlu0 %v401, 17
  %v716 = vpop.permute.xlu0 %715
  %717 = vrot.lane.b32.xlu0 %v399, 17
  %v718 = vpop.permute.xlu0 %717
  %719 = vrot.lane.b32.xlu0 %v411, 17
  %v720 = vpop.permute.xlu0 %719
  %721 = vrot.lane.b32.xlu0 %v412, 17
  %v722 = vpop.permute.xlu0 %721
  %723 = vrot.lane.b32.xlu0 %v410, 17
  %v724 = vpop.permute.xlu0 %723
  %725 = vrot.lane.b32.xlu0 %v422, 17
  %v726 = vpop.permute.xlu0 %725
  %727 = vrot.lane.b32.xlu0 %v423, 17
  %v728 = vpop.permute.xlu0 %727
  %729 = vrot.lane.b32.xlu0 %v421, 17
  %v730 = vpop.permute.xlu0 %729
  %731 = vrot.lane.b32.xlu0 %v425, 17
  %v732 = vpop.permute.xlu0 %731
  %733 = vrot.lane.b32.xlu0 %v428, 17
  %v734 = vpop.permute.xlu0 %733
  %735 = vrot.lane.b32.xlu0 %v427, 17
  %v736 = vpop.permute.xlu0 %735
  %737 = vrot.lane.b32.xlu0 %v431, 17
  %v738 = vpop.permute.xlu0 %737
  %739 = vrot.lane.b32.xlu0 %v436, 17
  %v740 = vpop.permute.xlu0 %739
  %741 = vrot.lane.b32.xlu0 %v437, 17
  %v742 = vpop.permute.xlu0 %741
  %743 = vrot.lane.b32.xlu0 %v440, 17
  %v744 = vpop.permute.xlu0 %743
  %745 = vrot.lane.b32.xlu0 %v445, 17
  %v746 = vpop.permute.xlu0 %745
  %747 = vrot.lane.b32.xlu0 %v446, 17
  %v748 = vpop.permute.xlu0 %747
  %749 = vrot.lane.b32.xlu0 %v457, 17
  %v750 = vpop.permute.xlu0 %749
  %751 = vrot.lane.b32.xlu0 %v468, 17
  %v752 = vpop.permute.xlu0 %751
  %753 = vrot.lane.b32.xlu0 %v469, 17
  %v754 = vpop.permute.xlu0 %753
  %755 = vrot.lane.b32.xlu0 %v463, 17
  %v756 = vpop.permute.xlu0 %755
  %757 = vrot.lane.b32.xlu0 %v470, 17
  %v758 = vpop.permute.xlu0 %757
  %759 = vrot.lane.b32.xlu0 %v471, 17
  %v760 = vpop.permute.xlu0 %759
  %v761 = vsel %vm580, %v654, %v656
  %v762 = vsel %vm580, %v656, %v658
  %v763 = vsel %vm580, %v660, %v662
  %v764 = vsel %vm580, %v662, %v664
  %v765 = vsel %vm580, %v666, %v668
  %v766 = vsel %vm580, %v668, %v670
  %v767 = vsel %vm580, %v672, %v674
  %v768 = vsel %vm580, %v674, %v676
  %v769 = vsel %vm580, %v678, %v680
  %v770 = vsel %vm580, %v680, %v682
  %v771 = vsel %vm580, %v684, %v686
  %v772 = vsel %vm580, %v686, %v688
  %v773 = vsel %vm580, %v690, %v692
  %v774 = vsel %vm580, %v692, %v694
  %v775 = vsel %vm580, %v696, %v698
  %v776 = vsel %vm580, %v698, %v700
  %v777 = vsel %vm580, %v702, %v704
  %v778 = vsel %vm580, %v704, %v706
  %v779 = vsel %vm580, %v708, %v710
  %v780 = vsel %vm580, %v710, %v712
  %v781 = vsel %vm580, %v714, %v716
  %v782 = vsel %vm580, %v716, %v718
  %v783 = vsel %vm580, %v720, %v722
  %v784 = vsel %vm580, %v722, %v724
  %v785 = vsel %vm580, %v726, %v728
  %v786 = vsel %vm580, %v728, %v730
  %v787 = vsel %vm580, %v732, %v734
  %v788 = vsel %vm580, %v734, %v736
  %v789 = vsel %vm580, %v738, %v740
  %v790 = vsel %vm580, %v740, %v742
  %v791 = vsel %vm580, %v744, %v746
  %v792 = vsel %vm580, %v746, %v748
  %v793 = vsel %vm580, %v750, %v752
  %v794 = vsel %vm580, %v752, %v754
  %v795 = vsel %vm580, %v756, %v758
  %v796 = vsel %vm580, %v758, %v760
  %v833 = vpack.c.bf16 %v583, %v581
  %v834 = vpack.c.bf16 %v584, %v582
  %v835 = vpack.c.bf16 %v763, %v761
  %v836 = vpack.c.bf16 %v764, %v762
  %v837 = vpack.c.bf16 %v587, %v585
  %v838 = vpack.c.bf16 %v588, %v586
  %v839 = vpack.c.bf16 %v767, %v765
  %v840 = vpack.c.bf16 %v768, %v766
  %v841 = vpack.c.bf16 %v591, %v589
  %v842 = vpack.c.bf16 %v592, %v590
  %v843 = vpack.c.bf16 %v771, %v769
  %v844 = vpack.c.bf16 %v772, %v770
  %v845 = vpack.c.bf16 %v595, %v593
  %v846 = vpack.c.bf16 %v596, %v594
  %v847 = vpack.c.bf16 %v775, %v773
  %v848 = vpack.c.bf16 %v776, %v774
  %v849 = vpack.c.bf16 %v599, %v597
  %v850 = vpack.c.bf16 %v600, %v598
  %v851 = vpack.c.bf16 %v779, %v777
  %v852 = vpack.c.bf16 %v780, %v778
  %v853 = vpack.c.bf16 %v603, %v601
  %v854 = vpack.c.bf16 %v604, %v602
  %v855 = vpack.c.bf16 %v783, %v781
  %v856 = vpack.c.bf16 %v784, %v782
  %v857 = vpack.c.bf16 %v607, %v605
  %v858 = vpack.c.bf16 %v608, %v606
  %v859 = vpack.c.bf16 %v787, %v785
  %v860 = vpack.c.bf16 %v788, %v786
  %v861 = vpack.c.bf16 %v611, %v609
  %v862 = vpack.c.bf16 %v612, %v610
  %v863 = vpack.c.bf16 %v791, %v789
  %v864 = vpack.c.bf16 %v792, %v790
  %v865 = vpack.c.bf16 %v615, %v613
  %v866 = vpack.c.bf16 %v616, %v614
  %v867 = vpack.c.bf16 %v795, %v793
  %v868 = vpack.c.bf16 %v796, %v794
  %v869 = vld [vmem:[%s3] sm:$0xff]
  %v870 = vld [vmem:[%s3 + $0x8] sm:$0xff]
  %v871 = vld [vmem:[%s3 + $0x10] sm:$0x33]
  %v875 = vunpack.c.l.b16 %v869
  %v876 = vunpack.c.h.b16 %v869
  %v877 = vunpack.c.l.b16 %v870
  %v878 = vunpack.c.h.b16 %v870
  %v879 = vunpack.c.l.b16 %v871
  %v880 = vunpack.c.h.b16 %v871
  %v881 = vpack.c.b16 %v877, %v875
  %v882 = vpack.c.b16 %v878, %v876
  %v883 = vpack.c.b16 %v879, %v879
  %v884 = vpack.c.b16 %v880, %v880
  %vm887 = vcmask 130048
  %v889 = vsel %vm887, %v882, 0
  %v892 = vsel %vm887, %v884, 0
  %894 = vmatprep.subr.bf16.mxu0 %v862
  %895 = vmatpush1.bf16.msra.mxu0 %v861
  %896 = vmatprep.subr.bf16.mxu0 %v858
  %897 = vmatpush1.bf16.msra.mxu0 %v857
  %898 = vmatprep.subr.bf16.mxu0 %v854
  %899 = vmatpush1.bf16.msra.mxu0 %v853
  %900 = vmatprep.subr.bf16.mxu0 %v850
  %901 = vmatpush1.bf16.msra.mxu0 %v849
  %902 = vmatprep.subr.bf16.mxu0 %v846
  %903 = vmatpush1.bf16.msra.mxu0 %v845
  %904 = vmatprep.subr.bf16.mxu0 %v842
  %905 = vmatpush1.bf16.msra.mxu0 %v841
  %906 = vmatprep.subr.bf16.mxu0 %v838
  %907 = vmatpush1.bf16.msra.mxu0 %v837
  %908 = vmatprep.subr.bf16.mxu0 %v834
  %909 = vmatpush1.bf16.msra.mxu0 %v833
  %910 = vmatprep.subr.bf16.mxu0 0
  %911 = vmatpush2.bf16.msra.mxu0 0
  %912 = vmatprep.subr.bf16.mxu0 0
  %913 = vmatpush2.bf16.msra.mxu0 0
  %914 = vmatprep.subr.bf16.mxu0 0
  %915 = vmatpush2.bf16.msra.mxu0 0
  %916 = vmatprep.subr.bf16.mxu0 0
  %917 = vmatpush2.bf16.msra.mxu0 0
  %918 = vmatprep.subr.bf16.mxu0 0
  %919 = vmatpush2.bf16.msra.mxu0 0
  %920 = vmatprep.subr.bf16.mxu0 0
  %921 = vmatpush2.bf16.msra.mxu0 0
  %922 = vmatprep.subr.bf16.mxu0 0
  %923 = vmatpush2.bf16.msra.mxu0 0
  %924 = vmatprep.subr.bf16.mxu0 %v866
  %925 = vmatpush2.bf16.msra.mxu0 %v865
  %926 = vmatprep.mubr.bf16.mxu0 %v889
  %927 = vmatmul.mubr.bf16.gmra.mxu0 %v881
  %v928 = vpop.f32.mrf.mxu0
  %v929 = vadd.f32 0.0, %v928
  %v930 = vpop.f32.mrf.mxu0
  %v931 = vadd.f32 0.0, %v930
  %v932 = vpop.f32.mrf.mxu0
  %v933 = vadd.f32 0.0, %v932
  %v934 = vpop.f32.mrf.mxu0
  %v935 = vadd.f32 0.0, %v934
  %936 = vmatprep.mubr.bf16.mxu0 %v892
  %937 = vmatmul.mubr.bf16.gmra.mxu0 %v883
  %v938 = vpop.f32.mrf.mxu0
  %v939 = vadd.f32 0.0, %v938
  %v940 = vpop.f32.mrf.mxu0
  %v941 = vadd.f32 0.0, %v940
  %v942 = vpop.f32.mrf.mxu0
  %v943 = vpop.f32.mrf.mxu0
  %944 = vdwg.mxu0
  %945 = vmatprep.subr.bf16.mxu0 %v864
  %946 = vmatpush1.bf16.msra.mxu0 %v863
  %947 = vmatprep.subr.bf16.mxu0 %v860
  %948 = vmatpush1.bf16.msra.mxu0 %v859
  %949 = vmatprep.subr.bf16.mxu0 %v856
  %950 = vmatpush1.bf16.msra.mxu0 %v855
  %951 = vmatprep.subr.bf16.mxu0 %v852
  %952 = vmatpush1.bf16.msra.mxu0 %v851
  %953 = vmatprep.subr.bf16.mxu0 %v848
  %954 = vmatpush1.bf16.msra.mxu0 %v847
  %955 = vmatprep.subr.bf16.mxu0 %v844
  %956 = vmatpush1.bf16.msra.mxu0 %v843
  %957 = vmatprep.subr.bf16.mxu0 %v840
  %958 = vmatpush1.bf16.msra.mxu0 %v839
  %959 = vmatprep.subr.bf16.mxu0 %v836
  %960 = vmatpush1.bf16.msra.mxu0 %v835
  %961 = vmatprep.subr.bf16.mxu0 0
  %962 = vmatpush2.bf16.msra.mxu0 0
  %963 = vmatprep.subr.bf16.mxu0 0
  %964 = vmatpush2.bf16.msra.mxu0 0
  %965 = vmatprep.subr.bf16.mxu0 0
  %966 = vmatpush2.bf16.msra.mxu0 0
  %967 = vmatprep.subr.bf16.mxu0 0
  %968 = vmatpush2.bf16.msra.mxu0 0
  %969 = vmatprep.subr.bf16.mxu0 0
  %970 = vmatpush2.bf16.msra.mxu0 0
  %971 = vmatprep.subr.bf16.mxu0 0
  %972 = vmatpush2.bf16.msra.mxu0 0
  %973 = vmatprep.subr.bf16.mxu0 0
  %974 = vmatpush2.bf16.msra.mxu0 0
  %975 = vmatprep.subr.bf16.mxu0 %v868
  %976 = vmatpush2.bf16.msra.mxu0 %v867
  %977 = vmatprep.mubr.bf16.mxu0 %v889
  %978 = vmatmul.mubr.bf16.gmra.mxu0 %v881
  %v979 = vpop.f32.mrf.mxu0
  %v980 = vadd.f32 0.0, %v979
  %v981 = vpop.f32.mrf.mxu0
  %v982 = vadd.f32 0.0, %v981
  %v983 = vpop.f32.mrf.mxu0
  %v984 = vadd.f32 0.0, %v983
  %v985 = vpop.f32.mrf.mxu0
  %v986 = vadd.f32 0.0, %v985
  %987 = vmatprep.mubr.bf16.mxu0 %v892
  %988 = vmatmul.mubr.bf16.gmra.mxu0 %v883
  %v989 = vpop.f32.mrf.mxu0
  %v990 = vadd.f32 0.0, %v989
  %v991 = vpop.f32.mrf.mxu0
  %v992 = vadd.f32 0.0, %v991
  %v993 = vpop.f32.mrf.mxu0
  %v994 = vpop.f32.mrf.mxu0
  %995 = vdwg.mxu0
  %v996 = vld [vmem:[%s2] sm:$0xff]
  %v997 = vunpack.c.l.bf16 %v996
  %v998 = vunpack.c.h.bf16 %v996
  %v1001 = vcombine.high %v997, %v997
  %v1002 = vcombine.high %v998, %v998
  %v1005 = vadd.f32 %v939, %v997
  %v1006 = vadd.f32 %v941, %v1001
  %v1007 = vadd.f32 %v990, %v998
  %v1008 = vadd.f32 %v992, %v1002
  %v1009 = vsel %vm87, %v1005, 0.0
  %v1010 = vsel %vm88, %v1006, 0.0
  %v1011 = vsel %vm95, %v1005, 0.0
  %v1012 = vsel %vm96, %v1006, 0.0
  %v1016 = vrot.slane 0.0, 5
  %v1017 = vrot.slane %v1005, 5
  %v1018 = vrot.slane %v1006, 5
  %1019 = vrot.lane.b32.xlu0 %v1016, 127
  %v1020 = vpop.permute.xlu0 %1019
  %1021 = vrot.lane.b32.xlu0 %v1017, 127
  %v1022 = vpop.permute.xlu0 %1021
  %1023 = vrot.lane.b32.xlu0 %v1018, 127
  %v1024 = vpop.permute.xlu0 %1023
  %v1025 = vsel %vm135, %v1020, %v1022
  %v1026 = vsel %vm135, %v1022, %v1024
  %v1032 = vrot.slane 0.0, 2
  %v1033 = vrot.slane %v1011, 2
  %v1034 = vrot.slane %v1012, 2
  %1035 = vrot.lane.b32.xlu0 %v1032, 126
  %v1036 = vpop.permute.xlu0 %1035
  %1037 = vrot.lane.b32.xlu0 %v1033, 126
  %v1038 = vpop.permute.xlu0 %1037
  %1039 = vrot.lane.b32.xlu0 %v1034, 126
  %v1040 = vpop.permute.xlu0 %1039
  %v1041 = vsel %vm147, %v1036, %v1038
  %v1042 = vsel %vm147, %v1038, %v1040
  %v1048 = vrot.slane 0.0, 7
  %v1049 = vrot.slane %v1009, 7
  %v1050 = vrot.slane %v1010, 7
  %1051 = vrot.lane.b32.xlu0 %v1048, 112
  %v1052 = vpop.permute.xlu0 %1051
  %1053 = vrot.lane.b32.xlu0 %v1049, 112
  %v1054 = vpop.permute.xlu0 %1053
  %1055 = vrot.lane.b32.xlu0 %v1050, 112
  %v1056 = vpop.permute.xlu0 %1055
  %v1057 = vsel %vm159, %v1052, %v1054
  %v1058 = vsel %vm159, %v1054, %v1056
  %v1062 = vrot.slane %v1005, 4
  %v1063 = vrot.slane %v1006, 4
  %1064 = vrot.lane.b32.xlu0 %v1062, 111
  %v1065 = vpop.permute.xlu0 %1064
  %1066 = vrot.lane.b32.xlu0 %v1063, 111
  %v1067 = vpop.permute.xlu0 %1066
  %v1068 = vsel %vm166, %v1065, %v1067
  %v1072 = vrot.slane %v1011, 1
  %v1073 = vrot.slane %v1012, 1
  %v1074 = vrot.slane 0.0, 1
  %1075 = vrot.lane.b32.xlu0 %v1072, 110
  %v1076 = vpop.permute.xlu0 %1075
  %1077 = vrot.lane.b32.xlu0 %v1073, 110
  %v1078 = vpop.permute.xlu0 %1077
  %1079 = vrot.lane.b32.xlu0 %v1074, 110
  %v1080 = vpop.permute.xlu0 %1079
  %v1081 = vsel %vm175, %v1076, %v1078
  %v1082 = vsel %vm175, %v1078, %v1080
  %v1086 = vrot.slane %v1009, 6
  %v1087 = vrot.slane %v1010, 6
  %v1088 = vrot.slane 0.0, 6
  %1089 = vrot.lane.b32.xlu0 %v1086, 96
  %v1090 = vpop.permute.xlu0 %1089
  %1091 = vrot.lane.b32.xlu0 %v1087, 96
  %v1092 = vpop.permute.xlu0 %1091
  %1093 = vrot.lane.b32.xlu0 %v1088, 96
  %v1094 = vpop.permute.xlu0 %1093
  %v1095 = vsel %vm185, %v1090, %v1092
  %v1096 = vsel %vm185, %v1092, %v1094
  %v1100 = vrot.slane %v1005, 3
  %v1101 = vrot.slane %v1006, 3
  %v1102 = vrot.slane 0.0, 3
  %1103 = vrot.lane.b32.xlu0 %v1100, 95
  %v1104 = vpop.permute.xlu0 %1103
  %1105 = vrot.lane.b32.xlu0 %v1101, 95
  %v1106 = vpop.permute.xlu0 %1105
  %1107 = vrot.lane.b32.xlu0 %v1102, 95
  %v1108 = vpop.permute.xlu0 %1107
  %v1109 = vsel %vm195, %v1104, %v1106
  %v1110 = vsel %vm195, %v1106, %v1108
  %1114 = vrot.lane.b32.xlu0 %v1011, 94
  %v1115 = vpop.permute.xlu0 %1114
  %1116 = vrot.lane.b32.xlu0 %v1012, 94
  %v1117 = vpop.permute.xlu0 %1116
  %1118 = vrot.lane.b32.xlu0 0.0, 94
  %v1119 = vpop.permute.xlu0 %1118
  %v1120 = vsel %vm204, %v1115, %v1117
  %v1121 = vsel %vm204, %v1117, %v1119
  %vm1122 = vcmask 1042432
  %v1123 = vsel %vm1122, 0.0, %v1025
  %v1124 = vsel %vm1122, %v1009, %v1026
  %v1125 = vsel %vm1122, %v1010, %v1024
  %vm1126 = vcmask 1045504
  %v1127 = vsel %vm1126, %v1123, %v1041
  %v1128 = vsel %vm1126, %v1124, %v1042
  %v1129 = vsel %vm1126, %v1125, %v1040
  %vm1130 = vcmask 1040384
  %v1131 = vsel %vm1130, %v1041, %v1057
  %v1132 = vsel %vm1130, %v1042, %v1058
  %v1133 = vsel %vm1130, %v1040, %v1056
  %vm1134 = vcmask 1043456
  %v1135 = vsel %vm1134, %v1131, %v1065
  %v1136 = vsel %vm1134, %v1132, %v1068
  %v1137 = vsel %vm1134, %v1133, %v1067
  %vm1138 = vcmask 1046528
  %v1139 = vsel %vm1138, %v1135, %v1076
  %v1140 = vsel %vm1138, %v1136, %v1081
  %v1141 = vsel %vm1138, %v1137, %v1082
  %vm1142 = vcmask 1041408
  %v1143 = vsel %vm1142, %v1076, %v1090
  %v1144 = vsel %vm1142, %v1081, %v1095
  %v1145 = vsel %vm1142, %v1082, %v1096
  %vm1146 = vcmask 1044480
  %v1147 = vsel %vm1146, %v1143, %v1104
  %v1148 = vsel %vm1146, %v1144, %v1109
  %v1149 = vsel %vm1146, %v1145, %v1110
  %v1150 = vsel %vm87, %v1007, 0.0
  %v1151 = vsel %vm88, %v1008, 0.0
  %v1152 = vsel %vm95, %v1007, 0.0
  %v1153 = vsel %vm96, %v1008, 0.0
  %v1156 = vrot.slane %v1007, 5
  %v1157 = vrot.slane %v1008, 5
  %1158 = vrot.lane.b32.xlu0 %v1156, 127
  %v1159 = vpop.permute.xlu0 %1158
  %1160 = vrot.lane.b32.xlu0 %v1157, 127
  %v1161 = vpop.permute.xlu0 %1160
  %v1162 = vsel %vm135, %v1020, %v1159
  %v1163 = vsel %vm135, %v1159, %v1161
  %v1169 = vrot.slane %v1152, 2
  %v1170 = vrot.slane %v1153, 2
  %1171 = vrot.lane.b32.xlu0 %v1169, 126
  %v1172 = vpop.permute.xlu0 %1171
  %1173 = vrot.lane.b32.xlu0 %v1170, 126
  %v1174 = vpop.permute.xlu0 %1173
  %v1175 = vsel %vm147, %v1036, %v1172
  %v1176 = vsel %vm147, %v1172, %v1174
  %v1182 = vrot.slane %v1150, 7
  %v1183 = vrot.slane %v1151, 7
  %1184 = vrot.lane.b32.xlu0 %v1182, 112
  %v1185 = vpop.permute.xlu0 %1184
  %1186 = vrot.lane.b32.xlu0 %v1183, 112
  %v1187 = vpop.permute.xlu0 %1186
  %v1188 = vsel %vm159, %v1052, %v1185
  %v1189 = vsel %vm159, %v1185, %v1187
  %v1193 = vrot.slane %v1007, 4
  %v1194 = vrot.slane %v1008, 4
  %1195 = vrot.lane.b32.xlu0 %v1193, 111
  %v1196 = vpop.permute.xlu0 %1195
  %1197 = vrot.lane.b32.xlu0 %v1194, 111
  %v1198 = vpop.permute.xlu0 %1197
  %v1199 = vsel %vm166, %v1196, %v1198
  %v1203 = vrot.slane %v1152, 1
  %v1204 = vrot.slane %v1153, 1
  %1205 = vrot.lane.b32.xlu0 %v1203, 110
  %v1206 = vpop.permute.xlu0 %1205
  %1207 = vrot.lane.b32.xlu0 %v1204, 110
  %v1208 = vpop.permute.xlu0 %1207
  %v1209 = vsel %vm175, %v1206, %v1208
  %v1210 = vsel %vm175, %v1208, %v1080
  %v1214 = vrot.slane %v1150, 6
  %v1215 = vrot.slane %v1151, 6
  %1216 = vrot.lane.b32.xlu0 %v1214, 96
  %v1217 = vpop.permute.xlu0 %1216
  %1218 = vrot.lane.b32.xlu0 %v1215, 96
  %v1219 = vpop.permute.xlu0 %1218
  %v1220 = vsel %vm185, %v1217, %v1219
  %v1221 = vsel %vm185, %v1219, %v1094
  %v1225 = vrot.slane %v1007, 3
  %v1226 = vrot.slane %v1008, 3
  %1227 = vrot.lane.b32.xlu0 %v1225, 95
  %v1228 = vpop.permute.xlu0 %1227
  %1229 = vrot.lane.b32.xlu0 %v1226, 95
  %v1230 = vpop.permute.xlu0 %1229
  %v1231 = vsel %vm195, %v1228, %v1230
  %v1232 = vsel %vm195, %v1230, %v1108
  %1236 = vrot.lane.b32.xlu0 %v1152, 94
  %v1237 = vpop.permute.xlu0 %1236
  %1238 = vrot.lane.b32.xlu0 %v1153, 94
  %v1239 = vpop.permute.xlu0 %1238
  %v1240 = vsel %vm204, %v1237, %v1239
  %v1241 = vsel %vm204, %v1239, %v1119
  %v1242 = vsel %vm1122, 0.0, %v1162
  %v1243 = vsel %vm1122, %v1150, %v1163
  %v1244 = vsel %vm1122, %v1151, %v1161
  %v1245 = vsel %vm1126, %v1242, %v1175
  %v1246 = vsel %vm1126, %v1243, %v1176
  %v1247 = vsel %vm1126, %v1244, %v1174
  %v1248 = vsel %vm1130, %v1175, %v1188
  %v1249 = vsel %vm1130, %v1176, %v1189
  %v1250 = vsel %vm1130, %v1174, %v1187
  %v1251 = vsel %vm1134, %v1248, %v1196
  %v1252 = vsel %vm1134, %v1249, %v1199
  %v1253 = vsel %vm1134, %v1250, %v1198
  %v1254 = vsel %vm1138, %v1251, %v1206
  %v1255 = vsel %vm1138, %v1252, %v1209
  %v1256 = vsel %vm1138, %v1253, %v1210
  %v1257 = vsel %vm1142, %v1206, %v1217
  %v1258 = vsel %vm1142, %v1209, %v1220
  %v1259 = vsel %vm1142, %v1210, %v1221
  %v1260 = vsel %vm1146, %v1257, %v1228
  %v1261 = vsel %vm1146, %v1258, %v1231
  %v1262 = vsel %vm1146, %v1259, %v1232
  %1272 = vrot.lane.b32.xlu0 %v1127, 17
  %v1273 = vpop.permute.xlu0 %1272
  %1274 = vrot.lane.b32.xlu0 %v1128, 17
  %v1275 = vpop.permute.xlu0 %1274
  %1276 = vrot.lane.b32.xlu0 %v1129, 17
  %v1277 = vpop.permute.xlu0 %1276
  %1278 = vrot.lane.b32.xlu0 %v1139, 17
  %v1279 = vpop.permute.xlu0 %1278
  %1280 = vrot.lane.b32.xlu0 %v1140, 17
  %v1281 = vpop.permute.xlu0 %1280
  %1282 = vrot.lane.b32.xlu0 %v1141, 17
  %v1283 = vpop.permute.xlu0 %1282
  %1284 = vrot.lane.b32.xlu0 %v1147, 17
  %v1285 = vpop.permute.xlu0 %1284
  %1286 = vrot.lane.b32.xlu0 %v1148, 17
  %v1287 = vpop.permute.xlu0 %1286
  %1288 = vrot.lane.b32.xlu0 %v1149, 17
  %v1289 = vpop.permute.xlu0 %1288
  %1290 = vrot.lane.b32.xlu0 %v1115, 17
  %v1291 = vpop.permute.xlu0 %1290
  %1292 = vrot.lane.b32.xlu0 %v1120, 17
  %v1293 = vpop.permute.xlu0 %1292
  %1294 = vrot.lane.b32.xlu0 %v1121, 17
  %v1295 = vpop.permute.xlu0 %1294
  %v1296 = vsel %vm580, %v1273, %v1275
  %v1297 = vsel %vm580, %v1275, %v1277
  %v1298 = vsel %vm580, %v1279, %v1281
  %v1299 = vsel %vm580, %v1281, %v1283
  %v1300 = vsel %vm580, %v1285, %v1287
  %v1301 = vsel %vm580, %v1287, %v1289
  %v1302 = vsel %vm580, %v1291, %v1293
  %v1303 = vsel %vm580, %v1293, %v1295
  %1321 = vrot.lane.b32.xlu0 %v1245, 17
  %v1322 = vpop.permute.xlu0 %1321
  %1323 = vrot.lane.b32.xlu0 %v1246, 17
  %v1324 = vpop.permute.xlu0 %1323
  %1325 = vrot.lane.b32.xlu0 %v1247, 17
  %v1326 = vpop.permute.xlu0 %1325
  %1327 = vrot.lane.b32.xlu0 %v1254, 17
  %v1328 = vpop.permute.xlu0 %1327
  %1329 = vrot.lane.b32.xlu0 %v1255, 17
  %v1330 = vpop.permute.xlu0 %1329
  %1331 = vrot.lane.b32.xlu0 %v1256, 17
  %v1332 = vpop.permute.xlu0 %1331
  %1333 = vrot.lane.b32.xlu0 %v1260, 17
  %v1334 = vpop.permute.xlu0 %1333
  %1335 = vrot.lane.b32.xlu0 %v1261, 17
  %v1336 = vpop.permute.xlu0 %1335
  %1337 = vrot.lane.b32.xlu0 %v1262, 17
  %v1338 = vpop.permute.xlu0 %1337
  %1339 = vrot.lane.b32.xlu0 %v1237, 17
  %v1340 = vpop.permute.xlu0 %1339
  %1341 = vrot.lane.b32.xlu0 %v1240, 17
  %v1342 = vpop.permute.xlu0 %1341
  %1343 = vrot.lane.b32.xlu0 %v1241, 17
  %v1344 = vpop.permute.xlu0 %1343
  %v1345 = vsel %vm580, %v1322, %v1324
  %v1346 = vsel %vm580, %v1324, %v1326
  %v1347 = vsel %vm580, %v1328, %v1330
  %v1348 = vsel %vm580, %v1330, %v1332
  %v1349 = vsel %vm580, %v1334, %v1336
  %v1350 = vsel %vm580, %v1336, %v1338
  %v1351 = vsel %vm580, %v1340, %v1342
  %v1352 = vsel %vm580, %v1342, %v1344
  %v1361 = vpack.c.bf16 %v1298, %v1296
  %v1362 = vpack.c.bf16 %v1299, %v1297
  %v1363 = vpack.c.bf16 %v1347, %v1345
  %v1364 = vpack.c.bf16 %v1348, %v1346
  %v1365 = vpack.c.bf16 %v1302, %v1300
  %v1366 = vpack.c.bf16 %v1303, %v1301
  %v1367 = vpack.c.bf16 %v1351, %v1349
  %v1368 = vpack.c.bf16 %v1352, %v1350
  %v1369 = vld [vmem:[%s4] sm:$0xf]
  %vm1370 = vcmask 220160
  %v1372 = vsel %vm1370, %v1369, 0
  %v1374 = vsel %vm1146, 4294967295, 65535
  %v1375 = vsel %vm1126, %v1374, 0
  %v1377 = vand.u32 %v1365, %v1375
  %v1380 = vand.u32 %v1366, %v1375
  %v1383 = vand.u32 %v1367, %v1375
  %v1386 = vand.u32 %v1368, %v1375
  %1388 = vmatprep.subr.bf16.mxu0 0
  %1389 = vmatpush1.bf16.msra.mxu0 0
  %1390 = vmatprep.subr.bf16.mxu0 0
  %1391 = vmatpush1.bf16.msra.mxu0 0
  %1392 = vmatprep.subr.bf16.mxu0 0
  %1393 = vmatpush1.bf16.msra.mxu0 0
  %1394 = vmatprep.subr.bf16.mxu0 0
  %1395 = vmatpush1.bf16.msra.mxu0 0
  %1396 = vmatprep.subr.bf16.mxu0 0
  %1397 = vmatpush1.bf16.msra.mxu0 0
  %1398 = vmatprep.subr.bf16.mxu0 0
  %1399 = vmatpush1.bf16.msra.mxu0 0
  %1400 = vmatprep.subr.bf16.mxu0 %v1380
  %1401 = vmatpush1.bf16.msra.mxu0 %v1377
  %1402 = vmatprep.subr.bf16.mxu0 %v1362
  %1403 = vmatpush1.bf16.msra.mxu0 %v1361
  %1404 = vmatprep.subr.bf16.mxu0 0
  %1405 = vmatpush2.bf16.msra.mxu0 0
  %1406 = vmatprep.subr.bf16.mxu0 0
  %1407 = vmatpush2.bf16.msra.mxu0 0
  %1408 = vmatprep.subr.bf16.mxu0 0
  %1409 = vmatpush2.bf16.msra.mxu0 0
  %1410 = vmatprep.subr.bf16.mxu0 0
  %1411 = vmatpush2.bf16.msra.mxu0 0
  %1412 = vmatprep.subr.bf16.mxu0 0
  %1413 = vmatpush2.bf16.msra.mxu0 0
  %1414 = vmatprep.subr.bf16.mxu0 0
  %1415 = vmatpush2.bf16.msra.mxu0 0
  %1416 = vmatprep.subr.bf16.mxu0 0
  %1417 = vmatpush2.bf16.msra.mxu0 0
  %1418 = vmatprep.subr.bf16.mxu0 0
  %1419 = vmatpush2.bf16.msra.mxu0 0
  %1420 = vmatprep.mubr.bf16.mxu0 0
  %1421 = vmatmul.mubr.bf16.gmra.mxu0 %v1372
  %v1422 = vpop.f32.mrf.mxu0
  %v1423 = vadd.f32 0.0, %v1422
  %v1424 = vpop.f32.mrf.mxu0
  %v1425 = vadd.f32 0.0, %v1424
  %v1426 = vpop.f32.mrf.mxu0
  %v1427 = vpop.f32.mrf.mxu0
  %1428 = vdwg.mxu0
  %1429 = vmatprep.subr.bf16.mxu0 0
  %1430 = vmatpush1.bf16.msra.mxu0 0
  %1431 = vmatprep.subr.bf16.mxu0 0
  %1432 = vmatpush1.bf16.msra.mxu0 0
  %1433 = vmatprep.subr.bf16.mxu0 0
  %1434 = vmatpush1.bf16.msra.mxu0 0
  %1435 = vmatprep.subr.bf16.mxu0 0
  %1436 = vmatpush1.bf16.msra.mxu0 0
  %1437 = vmatprep.subr.bf16.mxu0 0
  %1438 = vmatpush1.bf16.msra.mxu0 0
  %1439 = vmatprep.subr.bf16.mxu0 0
  %1440 = vmatpush1.bf16.msra.mxu0 0
  %1441 = vmatprep.subr.bf16.mxu0 %v1386
  %1442 = vmatpush1.bf16.msra.mxu0 %v1383
  %1443 = vmatprep.subr.bf16.mxu0 %v1364
  %1444 = vmatpush1.bf16.msra.mxu0 %v1363
  %1445 = vmatprep.subr.bf16.mxu0 0
  %1446 = vmatpush2.bf16.msra.mxu0 0
  %1447 = vmatprep.subr.bf16.mxu0 0
  %1448 = vmatpush2.bf16.msra.mxu0 0
  %1449 = vmatprep.subr.bf16.mxu0 0
  %1450 = vmatpush2.bf16.msra.mxu0 0
  %1451 = vmatprep.subr.bf16.mxu0 0
  %1452 = vmatpush2.bf16.msra.mxu0 0
  %1453 = vmatprep.subr.bf16.mxu0 0
  %1454 = vmatpush2.bf16.msra.mxu0 0
  %1455 = vmatprep.subr.bf16.mxu0 0
  %1456 = vmatpush2.bf16.msra.mxu0 0
  %1457 = vmatprep.subr.bf16.mxu0 0
  %1458 = vmatpush2.bf16.msra.mxu0 0
  %1459 = vmatprep.subr.bf16.mxu0 0
  %1460 = vmatpush2.bf16.msra.mxu0 0
  %1461 = vmatprep.mubr.bf16.mxu0 0
  %1462 = vmatmul.mubr.bf16.gmra.mxu0 %v1372
  %v1463 = vpop.f32.mrf.mxu0
  %v1464 = vadd.f32 0.0, %v1463
  %v1465 = vpop.f32.mrf.mxu0
  %v1466 = vadd.f32 0.0, %v1465
  %v1467 = vpop.f32.mrf.mxu0
  %v1468 = vpop.f32.mrf.mxu0
  %1469 = vdwg.mxu0
  %v1470 = vxor.u32 %v1423, 2147483648
  %v1471 = vxor.u32 %v1425, 2147483648
  %v1472 = vxor.u32 %v1464, 2147483648
  %v1473 = vxor.u32 %v1466, 2147483648
  %v1474 = vmul.f32 %v1470, 1.442695
  %v1475 = vpow.pop %v1474
  %v1476 = vmul.f32 %v1471, 1.442695
  %v1477 = vpow.pop %v1476
  %v1478 = vmul.f32 %v1472, 1.442695
  %v1479 = vpow.pop %v1478
  %v1480 = vmul.f32 %v1473, 1.442695
  %v1481 = vpow.pop %v1480
  %v1482 = vadd.f32 %v1475, 1.0
  %v1483 = vadd.f32 %v1477, 1.0
  %v1484 = vadd.f32 %v1479, 1.0
  %v1485 = vadd.f32 %v1481, 1.0
  %v1486 = vrcp.pop %v1482
  %v1487 = vmul.f32 1.0, %v1486
  %v1488 = vrcp.pop %v1483
  %v1489 = vmul.f32 1.0, %v1488
  %v1490 = vrcp.pop %v1484
  %v1491 = vmul.f32 1.0, %v1490
  %v1492 = vrcp.pop %v1485
  %v1493 = vmul.f32 1.0, %v1492
  %v1494 = vmul.f32 %v929, %v1487
  %v1495 = vmul.f32 %v931, %v1489
  %v1496 = vmul.f32 %v980, %v1491
  %v1497 = vmul.f32 %v982, %v1493
  %v1498 = vadd.f32 %v1494, %v101
  %v1499 = vadd.f32 %v1495, %v102
  %v1500 = vadd.f32 %v1496, %v292
  %v1501 = vadd.f32 %v1497, %v293
  %v1502 = vadd.f32 %v1498, %v933
  %v1503 = vadd.f32 %v1499, %v935
  %v1504 = vadd.f32 %v1500, %v984
  %v1505 = vadd.f32 %v1501, %v986
  %1506 = vst [vmem:[%s5] sm:$0xff] %v1502
  %1507 = vst [vmem:[%s5 + $0x8] sm:$0xff] %v1503
  %s1508 = scalar_lea.vmem %s5, 16
  %1509 = vst [vmem:[%s1508] sm:$0xff] %v1504
  %1510 = vst [vmem:[%s1508 + $0x8] sm:$0xff] %v1505
  // Predicated region
  $region22: #{sam_forward.1} parent=0 // pred_check
    _
  $region23: #{sam_forward.1} parent=0 // pred_check_branch
    %1512 = sbr.rel (0) target = $region25
  $region24: #{sam_forward.1} parent=0 // pred_region
    _
  $region25: #{sam_forward.1} parent=0 // pred_fallthru
    _
  // Predicated region
  $region26: #{sam_forward.1} parent=0 // pred_check
    _
  $region27: #{sam_forward.1} parent=0 // pred_check_branch
    %1514 = sbr.rel (0) target = $region29
  $region28: #{sam_forward.1} parent=0 // pred_region
    _
  $region29: #{sam_forward.1} parent=0 // pred_fallthru
    _

</llo_original>
